<compile_context>
chip_gen: v7x
topology: tpu7x:2x2x1
jax: 0.10.0
libtpu: 0.0.40
codegen_flags: <defaults>
</compile_context>

<pallas_src>
import math

import jax
import jax.numpy as jnp
from jax import lax
from jax.experimental import pallas as pl
from jax.experimental.pallas import tpu as pltpu


def _round_up(x, m):
    return ((x + m - 1) // m) * m


def pue_kernel(hist_ref, uemb_ref, mask_ref, rep_ref, sel_ref,
               wd_ref, bd_ref, wk_ref, wq_ref, bq_ref, wa_ref, eye_ref,
               out_ref):
    f32 = jnp.float32
    bf16 = jnp.bfloat16

    R, Dn = hist_ref.shape          # R = Bt * Hp, flattened rows of this batch tile
    Bt = rep_ref.shape[1]
    Hp = sel_ref.shape[1]
    Dn_pad = out_ref.shape[1]

    hist = hist_ref[...]            # [R, Dn]  bf16, only ever consumed by the MXU
    rep = rep_ref[...]              # [R, Bt]  bf16 {0,1}: rep[r,b] = (r // Hp == b)
    sel = sel_ref[...]              # [R, Hp]  bf16 {0,1}: sel[r,h] = (r %  Hp == h)

    # personalized query: q = relu(uemb @ Wd + bd) @ Wq + bq              [Bt, Da]
    # (tiny matmuls; kept in f32 for precision, cost is negligible)
    q_d = jnp.maximum(
        jnp.dot(uemb_ref[...], wd_ref[...], preferred_element_type=f32)
        + bd_ref[...], 0.0)
    q = jnp.dot(q_d, wq_ref[...], preferred_element_type=f32) + bq_ref[...]

    # Broadcast each user's query over its Hp history rows on the (bf16) MXU.
    # TODO(synk): on v5e a sublane replication (jnp.repeat) would take this off the MXU.
    qb = jnp.dot(rep, q.astype(bf16), preferred_element_type=f32)        # [R, Da]

    # CandidateAttention scores (bf16 MXU operands, f32 accumulate).
    k = jnp.dot(hist, wk_ref[...], preferred_element_type=f32)           # [R, Da]
    t = jnp.tanh(k + qb)                                                 # f32 (EUP)
    # score matvec on the MXU instead of an XLU cross-lane reduction
    s = jnp.dot(t, wa_ref[...], preferred_element_type=f32)              # [R, 1]

    # Softmax numerator. Masked rows are zeroed multiplicatively below, so no
    # -1e9 bias is needed; scores are tanh-bounded and the tile-wide max keeps
    # exp() <= 1 (no underflow hazard).
    m = jnp.max(s, axis=0, keepdims=True)                                # [1, 1]
    e = jnp.exp(s - m)                                                   # [R, 1]

    # Expand the compact [Bt, Hp] mask to the flattened-row layout with one
    # small MXU contraction:  a_mask[r, b] = mask[b, r % Hp]  (exact {0,1}).
    a_mask = lax.dot_general(sel, mask_ref[...].astype(bf16),
                             (((1,), (1,)), ((), ())),
                             preferred_element_type=f32)                 # [R, Bt]

    # Fold mask and softmax numerator into the segment one-hot: avoids any
    # [R, Dn]-sized temporary and keeps hist untouched in bf16.
    w = rep.astype(f32) * a_mask * e                                     # [R, Bt]
    w_bf = w.astype(bf16)

    # Per-user weighted pooling: contract the row axis directly (no repT).
    num = lax.dot_general(w_bf, hist, (((0,), (0,)), ((), ())),
                          preferred_element_type=f32)                    # [Bt, Dn]
    ones_col = jnp.ones((R, 1), dtype=bf16)
    den = lax.dot_general(w_bf, ones_col, (((0,), (0,)), ((), ())),
                          preferred_element_type=f32)                    # [Bt, 1]
    # TODO(synk): a fully-masked user gives den == 0; the torch reference
    # degenerates to a uniform average there -- we emit a zero row (no NaNs).
    den = jnp.where(den > 0.0, den, 1.0)
    pooled = num * pl.reciprocal(den)                                    # [Bt, Dn]

    # Lane-dense store: pad the feature dim to a 128-multiple with the hoisted
    # zero-padded identity (statically skipped when Dn is already aligned).
    if Dn_pad != Dn:
        pooled = jnp.dot(pooled, eye_ref[...], preferred_element_type=f32)
    out_ref[...] = pooled.astype(out_ref.dtype)


def pue_forward(history_embedding, user_embedding, user_history_mask,
                candidate_news_representation, params, *, block_b=64):
    """Pallas implementation of PUE.forward (user-representation branch)."""
    B, H, Dn = history_embedding.shape
    Du = user_embedding.shape[1]
    Dp = params["Wd"].shape[1]
    Da = params["Wk"].shape[1]
    news_num = candidate_news_representation.shape[1]   # static shape only

    f32 = jnp.float32
    bf16 = jnp.bfloat16

    # --- tiling --------------------------------------------------------------
    Hp = _round_up(H, 8)                         # sublane-align the history axis
    # batch rows per grid step; keep >=2 grid steps when the batch allows so the
    # "parallel" axis can span both v7x TensorCores.  v6e/v5e may raise block_b.
    Bt = _round_up(min(block_b, max(B // 2, 8)), 8)
    B_pad = _round_up(B, Bt)
    R = Bt * Hp
    Dn_pad = _round_up(Dn, 128)                  # lane-dense output width

    # --- host-side layout plumbing (cheap / fused XLA ops) --------------------
    # history stays bf16 end-to-end (no f32 materialization of the big tensor).
    hist = history_embedding.astype(bf16)
    uemb = user_embedding.astype(f32)
    m01 = (user_history_mask > 0).astype(f32)
    if (B_pad != B) or (Hp != H):
        hist = jnp.pad(hist, ((0, B_pad - B), (0, Hp - H), (0, 0)))
        m01 = jnp.pad(m01, ((0, B_pad - B), (0, Hp - H)))
    if B_pad != B:
        uemb = jnp.pad(uemb, ((0, B_pad - B), (0, 0)))
    hist_flat = hist.reshape(B_pad * Hp, Dn)     # contiguous reshape -> free

    # grid-invariant constants: DMA'd once, VMEM-resident (constant index maps)
    r_idx = jnp.arange(R)
    rep = (r_idx[:, None] // Hp == jnp.arange(Bt)[None, :]).astype(bf16)   # [R, Bt]
    sel = (r_idx[:, None] % Hp == jnp.arange(Hp)[None, :]).astype(bf16)    # [R, Hp]
    eye_pad = jnp.eye(Dn, Dn_pad, dtype=f32)                               # [Dn, Dn_pad]

    wk_bf = params["Wk"].astype(bf16)
    wa_col = params["wa"].reshape(Da, 1).astype(f32)

    def const_spec(shape):
        return pl.BlockSpec(shape, lambda i, _s=shape: (0,) * len(_s))

    # scoped-VMEM limit derived from the chip: ~48 MiB on v7x, ~96 MiB on v5e/v6e
    try:
        info = pltpu.get_tpu_info()
        vmem_cap = getattr(info, "vmem_capacity_bytes", 64 * 1024 * 1024)
    except Exception:
        vmem_cap = 64 * 1024 * 1024
    vmem_limit = int(min(vmem_cap * 3 // 4, 100 * 1024 * 1024))

    # NOTE: the constant-index weight specs could additionally use
    # pipeline_mode=pl.Buffered(1) to drop their second VMEM buffer (polish).
    out_padded = pl.pallas_call(
        pue_kernel,
        out_shape=jax.ShapeDtypeStruct((B_pad, Dn_pad), f32),
        grid_spec=pltpu.PrefetchScalarGridSpec(
            num_scalar_prefetch=0,
            grid=(B_pad // Bt,),
            in_specs=[
                pl.BlockSpec((R, Dn), lambda i: (i, 0)),     # history (flat, bf16)
                pl.BlockSpec((Bt, Du), lambda i: (i, 0)),    # user embedding (f32)
                pl.BlockSpec((Bt, Hp), lambda i: (i, 0)),    # {0,1} history mask
                const_spec((R, Bt)),                         # rep  (segment one-hot)
                const_spec((R, Hp)),                         # sel  (r % Hp one-hot)
                const_spec((Du, Dp)),                        # Wd
                const_spec((1, Dp)),                         # bd
                const_spec((Dn, Da)),                        # Wk (bf16)
                const_spec((Dp, Da)),                        # Wq
                const_spec((1, Da)),                         # bq
                const_spec((Da, 1)),                         # wa (column)
                const_spec((Dn, Dn_pad)),                    # lane-pad projection
            ],
            out_specs=pl.BlockSpec((Bt, Dn_pad), lambda i: (i, 0)),
        ),
        compiler_params=pltpu.CompilerParams(
            dimension_semantics=("parallel",),   # shards batch tiles across v7x TCs
            vmem_limit_bytes=vmem_limit),
    )(hist_flat, uemb, m01, rep, sel,
      params["Wd"], params["bd"], wk_bf, params["Wq"], params["bq"],
      wa_col, eye_pad)

    user_rep = out_padded[:B, :Dn]
    # torch: .unsqueeze(1).expand(-1, news_num, -1)  -- pure broadcast glue
    return jnp.broadcast_to(user_rep[:, None, :], (B, news_num, Dn))


def pue_reference(history_embedding, user_embedding, user_history_mask,
                  candidate_news_representation, params):
    """Pure-JAX f32 reference mirroring the PyTorch semantics."""
    news_num = candidate_news_representation.shape[1]
    q_d = jax.nn.relu(user_embedding @ params["Wd"] + params["bd"])           # [B, Dp]
    k = history_embedding @ params["Wk"]                                       # [B, H, Da]
    q = q_d @ params["Wq"] + params["bq"]                                      # [B, Da]
    a = jnp.sum(jnp.tanh(k + q[:, None, :]) * params["wa"], axis=-1)           # [B, H]
    a = jnp.where(user_history_mask > 0, a, -1e9)
    alpha = jax.nn.softmax(a, axis=1)
    out = jnp.einsum("bh,bhd->bd", alpha, history_embedding)                   # [B, Dn]
    return jnp.broadcast_to(out[:, None, :], (out.shape[0], news_num, out.shape[1]))


def init_params(key, user_dim, pers_dim, news_dim, att_dim):
    def xavier(k, shape, gain=1.0):
        fan_in, fan_out = shape
        lim = gain * math.sqrt(6.0 / (fan_in + fan_out))
        return jax.random.uniform(k, shape, jnp.float32, -lim, lim)

    k1, k2, k3, k4 = jax.random.split(key, 4)
    relu_gain = math.sqrt(2.0)
    return {
        "Wd": xavier(k1, (user_dim, pers_dim), relu_gain),   # dense.weight (xavier, relu gain)
        "bd": jnp.zeros((1, pers_dim), jnp.float32),         # dense.bias = 0
        "Wk": xavier(k2, (news_dim, att_dim)),               # CandidateAttention K
        "Wq": xavier(k3, (pers_dim, att_dim)),                # CandidateAttention Q
        "bq": jnp.zeros((1, att_dim), jnp.float32),
        "wa": xavier(k4, (1, att_dim)),                       # attention scalar weight
    }


if __name__ == "__main__":
    B, H, news_num = 16, 8, 4
    news_dim, user_dim, pers_dim, att_dim = 32, 32, 16, 16

    key = jax.random.PRNGKey(0)
    kp, k1, k2, k3 = jax.random.split(key, 4)

    params = init_params(kp, user_dim, pers_dim, news_dim, att_dim)

    history_embedding = jax.random.normal(k1, (B, H, news_dim), jnp.float32)
    user_embedding = jax.random.normal(k2, (B, user_dim), jnp.float32)
    lengths = 1 + (jnp.arange(B) * 3) % H      # at least one valid history slot per user
    user_history_mask = (jnp.arange(H)[None, :] < lengths[:, None]).astype(jnp.float32)
    candidate_news_representation = jax.random.normal(k3, (B, news_num, news_dim), jnp.float32)

    out = pue_forward(history_embedding, user_embedding, user_history_mask,
                      candidate_news_representation, params)
    out = jax.block_until_ready(out)

    ref = pue_reference(history_embedding, user_embedding, user_history_mask,
                        candidate_news_representation, params)

    assert out.shape == (B, news_num, news_dim), out.shape
    # tolerance sized for bf16 MXU operands (f32 accumulate) vs the f32 reference
    assert jnp.allclose(out, ref, atol=5e-2, rtol=5e-2), float(jnp.max(jnp.abs(out - ref)))
    print("KERNEL_OK")
</pallas_src>

<mosaic_0001>
module attributes {stable_mosaic.version = 11 : i64} {
  func.func @pue_kernel(%arg0: i32, %arg1: memref<64x32xbf16, #tpu.memory_space<vmem>>, %arg2: memref<8x32xf32, #tpu.memory_space<vmem>>, %arg3: memref<8x8xf32, #tpu.memory_space<vmem>>, %arg4: memref<64x8xbf16, #tpu.memory_space<vmem>>, %arg5: memref<64x8xbf16, #tpu.memory_space<vmem>>, %arg6: memref<32x16xf32, #tpu.memory_space<vmem>>, %arg7: memref<1x16xf32, #tpu.memory_space<vmem>>, %arg8: memref<32x16xbf16, #tpu.memory_space<vmem>>, %arg9: memref<16x16xf32, #tpu.memory_space<vmem>>, %arg10: memref<1x16xf32, #tpu.memory_space<vmem>>, %arg11: memref<16x1xf32, #tpu.memory_space<vmem>>, %arg12: memref<32x128xf32, #tpu.memory_space<vmem>>, %arg13: memref<8x128xf32, #tpu.memory_space<vmem>>) attributes {dimension_semantics = [#tpu.dimension_semantics<parallel>], iteration_bounds = array<i64: 2>, scalar_prefetch = 0 : i64, scratch_operands = 0 : i64, tpu.core_type = #tpu.core_type<tc>, window_params = [{transform_indices = @transform_0, window_bounds = array<i64: 64, 32>}, {transform_indices = @transform_1, window_bounds = array<i64: 8, 32>}, {transform_indices = @transform_2, window_bounds = array<i64: 8, 8>}, {pipeline_mode = #tpu.pipeline_mode<synchronous>, transform_indices = @transform_3, window_bounds = array<i64: 64, 8>}, {pipeline_mode = #tpu.pipeline_mode<synchronous>, transform_indices = @transform_4, window_bounds = array<i64: 64, 8>}, {pipeline_mode = #tpu.pipeline_mode<synchronous>, transform_indices = @transform_5, window_bounds = array<i64: 32, 16>}, {pipeline_mode = #tpu.pipeline_mode<synchronous>, transform_indices = @transform_6, window_bounds = array<i64: 1, 16>}, {pipeline_mode = #tpu.pipeline_mode<synchronous>, transform_indices = @transform_7, window_bounds = array<i64: 32, 16>}, {pipeline_mode = #tpu.pipeline_mode<synchronous>, transform_indices = @transform_8, window_bounds = array<i64: 16, 16>}, {pipeline_mode = #tpu.pipeline_mode<synchronous>, transform_indices = @transform_9, window_bounds = array<i64: 1, 16>}, {pipeline_mode = #tpu.pipeline_mode<synchronous>, transform_indices = @transform_10, window_bounds = array<i64: 16, 1>}, {pipeline_mode = #tpu.pipeline_mode<synchronous>, transform_indices = @transform_11, window_bounds = array<i64: 32, 128>}, {transform_indices = @transform_12, window_bounds = array<i64: 8, 128>}]} {
    %c0 = arith.constant 0 : index
    %c0_0 = arith.constant 0 : index
    %0 = vector.load %arg1[%c0, %c0_0] : memref<64x32xbf16, #tpu.memory_space<vmem>>, vector<64x32xbf16>
    %c0_1 = arith.constant 0 : index
    %c0_2 = arith.constant 0 : index
    %1 = vector.load %arg4[%c0_1, %c0_2] : memref<64x8xbf16, #tpu.memory_space<vmem>>, vector<64x8xbf16>
    %c0_3 = arith.constant 0 : index
    %c0_4 = arith.constant 0 : index
    %2 = vector.load %arg5[%c0_3, %c0_4] : memref<64x8xbf16, #tpu.memory_space<vmem>>, vector<64x8xbf16>
    %c0_5 = arith.constant 0 : index
    %c0_6 = arith.constant 0 : index
    %3 = vector.load %arg2[%c0_5, %c0_6] : memref<8x32xf32, #tpu.memory_space<vmem>>, vector<8x32xf32>
    %c0_7 = arith.constant 0 : index
    %c0_8 = arith.constant 0 : index
    %4 = vector.load %arg6[%c0_7, %c0_8] : memref<32x16xf32, #tpu.memory_space<vmem>>, vector<32x16xf32>
    %cst = arith.constant dense<0.000000e+00> : vector<8x16xf32>
    %5 = tpu.matmul %3, %4, %cst {dimension_numbers = #tpu.dot_dimension_numbers<[1], [0], [0], [1], [0, 0, 1, 1], [], []>} : vector<8x32xf32>, vector<32x16xf32>, vector<8x16xf32> -> vector<8x16xf32>
    %c0_9 = arith.constant 0 : index
    %c0_10 = arith.constant 0 : index
    %6 = vector.load %arg7[%c0_9, %c0_10] : memref<1x16xf32, #tpu.memory_space<vmem>>, vector<1x16xf32>
    %7 = vector.broadcast %6 : vector<1x16xf32> to vector<8x16xf32>
    %8 = arith.addf %5, %7 : vector<8x16xf32>
    %cst_11 = arith.constant 0.000000e+00 : f32
    %9 = vector.broadcast %cst_11 : f32 to vector<8x16xf32>
    %10 = arith.maximumf %8, %9 : vector<8x16xf32>
    %c0_12 = arith.constant 0 : index
    %c0_13 = arith.constant 0 : index
    %11 = vector.load %arg9[%c0_12, %c0_13] : memref<16x16xf32, #tpu.memory_space<vmem>>, vector<16x16xf32>
    %cst_14 = arith.constant dense<0.000000e+00> : vector<8x16xf32>
    %12 = tpu.matmul %10, %11, %cst_14 {dimension_numbers = #tpu.dot_dimension_numbers<[1], [0], [0], [1], [0, 0, 1, 1], [], []>} : vector<8x16xf32>, vector<16x16xf32>, vector<8x16xf32> -> vector<8x16xf32>
    %c0_15 = arith.constant 0 : index
    %c0_16 = arith.constant 0 : index
    %13 = vector.load %arg10[%c0_15, %c0_16] : memref<1x16xf32, #tpu.memory_space<vmem>>, vector<1x16xf32>
    %14 = vector.broadcast %13 : vector<1x16xf32> to vector<8x16xf32>
    %15 = arith.addf %12, %14 : vector<8x16xf32>
    %16 = arith.truncf %15 : vector<8x16xf32> to vector<8x16xbf16>
    %cst_17 = arith.constant dense<0.000000e+00> : vector<64x16xf32>
    %17 = tpu.matmul %1, %16, %cst_17 {dimension_numbers = #tpu.dot_dimension_numbers<[1], [0], [0], [1], [0, 0, 1, 1], [], []>} : vector<64x8xbf16>, vector<8x16xbf16>, vector<64x16xf32> -> vector<64x16xf32>
    %c0_18 = arith.constant 0 : index
    %c0_19 = arith.constant 0 : index
    %18 = vector.load %arg8[%c0_18, %c0_19] : memref<32x16xbf16, #tpu.memory_space<vmem>>, vector<32x16xbf16>
    %cst_20 = arith.constant dense<0.000000e+00> : vector<64x16xf32>
    %19 = tpu.matmul %0, %18, %cst_20 {dimension_numbers = #tpu.dot_dimension_numbers<[1], [0], [0], [1], [0, 0, 1, 1], [], []>} : vector<64x32xbf16>, vector<32x16xbf16>, vector<64x16xf32> -> vector<64x16xf32>
    %20 = arith.addf %19, %17 : vector<64x16xf32>
    %21 = math.tanh %20 : vector<64x16xf32>
    %c0_21 = arith.constant 0 : index
    %c0_22 = arith.constant 0 : index
    %22 = vector.load %arg11[%c0_21, %c0_22] : memref<16x1xf32, #tpu.memory_space<vmem>>, vector<16x1xf32>
    %cst_23 = arith.constant dense<0.000000e+00> : vector<64x1xf32>
    %23 = tpu.matmul %21, %22, %cst_23 {dimension_numbers = #tpu.dot_dimension_numbers<[1], [0], [0], [1], [0, 0, 1, 1], [], []>} : vector<64x16xf32>, vector<16x1xf32>, vector<64x1xf32> -> vector<64x1xf32>
    %cst_24 = arith.constant dense<0xFF800000> : vector<1xf32>
    %24 = vector.multi_reduction <maximumf>, %23, %cst_24 [0] : vector<64x1xf32> to vector<1xf32>
    %25 = vector.shape_cast %24 : vector<1xf32> to vector<1x1xf32>
    %26 = vector.broadcast %25 : vector<1x1xf32> to vector<64x1xf32>
    %27 = arith.subf %23, %26 : vector<64x1xf32>
    %28 = math.exp %27 : vector<64x1xf32>
    %c0_25 = arith.constant 0 : index
    %c0_26 = arith.constant 0 : index
    %29 = vector.load %arg3[%c0_25, %c0_26] : memref<8x8xf32, #tpu.memory_space<vmem>>, vector<8x8xf32>
    %30 = arith.truncf %29 : vector<8x8xf32> to vector<8x8xbf16>
    %cst_27 = arith.constant dense<0.000000e+00> : vector<64x8xf32>
    %31 = tpu.matmul %2, %30, %cst_27 {dimension_numbers = #tpu.dot_dimension_numbers<[1], [1], [0], [0], [0, 0, 1, 0], [], []>} : vector<64x8xbf16>, vector<8x8xbf16>, vector<64x8xf32> -> vector<64x8xf32>
    %32 = arith.extf %1 : vector<64x8xbf16> to vector<64x8xf32>
    %33 = arith.mulf %32, %31 : vector<64x8xf32>
    %34 = vector.broadcast %28 : vector<64x1xf32> to vector<64x8xf32>
    %35 = arith.mulf %33, %34 : vector<64x8xf32>
    %36 = arith.truncf %35 : vector<64x8xf32> to vector<64x8xbf16>
    %cst_28 = arith.constant dense<0.000000e+00> : vector<8x32xf32>
    %37 = tpu.matmul %36, %0, %cst_28 {dimension_numbers = #tpu.dot_dimension_numbers<[0], [0], [1], [1], [0, 1, 1, 1], [], []>} : vector<64x8xbf16>, vector<64x32xbf16>, vector<8x32xf32> -> vector<8x32xf32>
    %cst_29 = arith.constant 1.000000e+00 : bf16
    %38 = vector.broadcast %cst_29 : bf16 to vector<64x1xbf16>
    %cst_30 = arith.constant dense<0.000000e+00> : vector<8x1xf32>
    %39 = tpu.matmul %36, %38, %cst_30 {dimension_numbers = #tpu.dot_dimension_numbers<[0], [0], [1], [1], [0, 1, 1, 1], [], []>} : vector<64x8xbf16>, vector<64x1xbf16>, vector<8x1xf32> -> vector<8x1xf32>
    %cst_31 = arith.constant 0.000000e+00 : f32
    %40 = vector.broadcast %cst_31 : f32 to vector<8x1xf32>
    %41 = arith.cmpf ogt, %39, %40 : vector<8x1xf32>
    %cst_32 = arith.constant 1.000000e+00 : f32
    %42 = vector.broadcast %cst_32 : f32 to vector<8x1xf32>
    %43 = arith.select %41, %39, %42 : vector<8x1xi1>, vector<8x1xf32>
    %44 = tpu.reciprocal %43 : vector<8x1xf32> -> vector<8x1xf32>
    %45 = vector.broadcast %44 : vector<8x1xf32> to vector<8x32xf32>
    %46 = arith.mulf %37, %45 : vector<8x32xf32>
    %c0_33 = arith.constant 0 : index
    %c0_34 = arith.constant 0 : index
    %47 = vector.load %arg12[%c0_33, %c0_34] : memref<32x128xf32, #tpu.memory_space<vmem>>, vector<32x128xf32>
    %cst_35 = arith.constant dense<0.000000e+00> : vector<8x128xf32>
    %48 = tpu.matmul %46, %47, %cst_35 {dimension_numbers = #tpu.dot_dimension_numbers<[1], [0], [0], [1], [0, 0, 1, 1], [], []>} : vector<8x32xf32>, vector<32x128xf32>, vector<8x128xf32> -> vector<8x128xf32>
    %c0_36 = arith.constant 0 : index
    %c0_37 = arith.constant 0 : index
    %49 = vector.load %arg13[%c0_36, %c0_37] : memref<8x128xf32, #tpu.memory_space<vmem>>, vector<8x128xf32>
    tpu.vector_store %arg13[%c0_36, %c0_37], %48 {strides = array<i32>} : memref<8x128xf32, #tpu.memory_space<vmem>>, vector<8x128xf32>,
    return
  }
  func.func @transform_0(%arg0: i32) -> (i32, i32) {
    %c0_i32 = arith.constant 0 : i32
    %c0_i32_0 = arith.constant 0 : i32
    return %arg0, %c0_i32 : i32, i32
  }
  func.func @transform_1(%arg0: i32) -> (i32, i32) {
    %c0_i32 = arith.constant 0 : i32
    %c0_i32_0 = arith.constant 0 : i32
    return %arg0, %c0_i32 : i32, i32
  }
  func.func @transform_2(%arg0: i32) -> (i32, i32) {
    %c0_i32 = arith.constant 0 : i32
    %c0_i32_0 = arith.constant 0 : i32
    return %arg0, %c0_i32 : i32, i32
  }
  func.func @transform_3(%arg0: i32) -> (i32, i32) {
    %c0_i32 = arith.constant 0 : i32
    %c0_i32_0 = arith.constant 0 : i32
    %c0_i32_1 = arith.constant 0 : i32
    return %c0_i32, %c0_i32_0 : i32, i32
  }
  func.func @transform_4(%arg0: i32) -> (i32, i32) {
    %c0_i32 = arith.constant 0 : i32
    %c0_i32_0 = arith.constant 0 : i32
    %c0_i32_1 = arith.constant 0 : i32
    return %c0_i32, %c0_i32_0 : i32, i32
  }
  func.func @transform_5(%arg0: i32) -> (i32, i32) {
    %c0_i32 = arith.constant 0 : i32
    %c0_i32_0 = arith.constant 0 : i32
    %c0_i32_1 = arith.constant 0 : i32
    return %c0_i32, %c0_i32_0 : i32, i32
  }
  func.func @transform_6(%arg0: i32) -> (i32, i32) {
    %c0_i32 = arith.constant 0 : i32
    %c0_i32_0 = arith.constant 0 : i32
    %c0_i32_1 = arith.constant 0 : i32
    return %c0_i32, %c0_i32_0 : i32, i32
  }
  func.func @transform_7(%arg0: i32) -> (i32, i32) {
    %c0_i32 = arith.constant 0 : i32
    %c0_i32_0 = arith.constant 0 : i32
    %c0_i32_1 = arith.constant 0 : i32
    return %c0_i32, %c0_i32_0 : i32, i32
  }
  func.func @transform_8(%arg0: i32) -> (i32, i32) {
    %c0_i32 = arith.constant 0 : i32
    %c0_i32_0 = arith.constant 0 : i32
    %c0_i32_1 = arith.constant 0 : i32
    return %c0_i32, %c0_i32_0 : i32, i32
  }
  func.func @transform_9(%arg0: i32) -> (i32, i32) {
    %c0_i32 = arith.constant 0 : i32
    %c0_i32_0 = arith.constant 0 : i32
    %c0_i32_1 = arith.constant 0 : i32
    return %c0_i32, %c0_i32_0 : i32, i32
  }
  func.func @transform_10(%arg0: i32) -> (i32, i32) {
    %c0_i32 = arith.constant 0 : i32
    %c0_i32_0 = arith.constant 0 : i32
    %c0_i32_1 = arith.constant 0 : i32
    return %c0_i32, %c0_i32_0 : i32, i32
  }
  func.func @transform_11(%arg0: i32) -> (i32, i32) {
    %c0_i32 = arith.constant 0 : i32
    %c0_i32_0 = arith.constant 0 : i32
    %c0_i32_1 = arith.constant 0 : i32
    return %c0_i32, %c0_i32_0 : i32, i32
  }
  func.func @transform_12(%arg0: i32) -> (i32, i32) {
    %c0_i32 = arith.constant 0 : i32
    %c0_i32_0 = arith.constant 0 : i32
    return %arg0, %c0_i32 : i32, i32
  }
}

</mosaic_0001>

<llo_original>
// kernel: tpu_custom_call.1
$region0: #{tpu_custom_call.1}
  #allocation0 [shape = 'u32[]', space=smem, size = 0x4, offset = 0x4, fixed_abs, tag = 'smem constant byte address 0x4 - core index']
  #allocation1 [shape = 'u32[144,128]{1,0:T(1,128)}', space=vmem, size = 0x12000, scoped, tag = 'internal scratch']
  %s0 = inlined_call_operand.vmem [shape: bf16[128,32], index: 0, kind: input, shape index: {}]
  %s1 = inlined_call_operand.vmem [shape: f32[16,32], index: 1, kind: input, shape index: {}]
  %s2 = inlined_call_operand.vmem [shape: f32[16,8], index: 2, kind: input, shape index: {}]
  %s3 = inlined_call_operand.vmem [shape: bf16[64,8], index: 3, kind: input, shape index: {}]
  %s4 = inlined_call_operand.vmem [shape: bf16[64,8], index: 4, kind: input, shape index: {}]
  %s5 = inlined_call_operand.vmem [shape: f32[32,16], index: 5, kind: input, shape index: {}]
  %s6 = inlined_call_operand.vmem [shape: f32[1,16], index: 6, kind: input, shape index: {}]
  %s7 = inlined_call_operand.vmem [shape: bf16[32,16], index: 7, kind: input, shape index: {}]
  %s8 = inlined_call_operand.vmem [shape: f32[16,16], index: 8, kind: input, shape index: {}]
  %s9 = inlined_call_operand.vmem [shape: f32[1,16], index: 9, kind: input, shape index: {}]
  %s10 = inlined_call_operand.vmem [shape: f32[16,1], index: 10, kind: input, shape index: {}]
  %s11 = inlined_call_operand.vmem [shape: f32[32,128], index: 11, kind: input, shape index: {}]
  %s12 = inlined_call_operand.hbm [shape: f32[16,128], index: 12, kind: output, shape index: {}]
  %s13 = sld [smem:[#allocation0]]
  $region81: #{tpu_custom_call.1} parent=0
    _
  %s15 = ssub.s32 1, %s13
  %s16 = scalar_select 0, %s15, %s13
  $region1: #{tpu_custom_call.1} parent=0
    #allocation2 [shape = 'u8[8192]{0}', space=vmem, size = 0x2000, scoped, tag = 'output window, operand 0']
    #allocation3 [shape = 's32[2]{0}', space=sflag, size = 0x8, scoped, tag = 'scoped memory for tpu_custom_call.1']
    %17 = vsyncpa [#allocation3], 0
    %s18 = scalar_lea.sflag [#allocation3], 1
    %19 = vsyncpa %s18, 0
    loop: start=0, step=1, limit=4
    $region2: #{tpu_custom_call.1} parent=1 // loop_pre_header
      _
    $region3: #{tpu_custom_call.1} parent=1 // loop_header
      %s21 = sphi 0, %s25
      %p22 = scmp.ge.s32.totalorder %s21, 4
      %s31 = sphi 0, %s33
      %s34 = sphi 0, %s31
      %s35 = sphi 0, %s34
      %s51 = sphi 0, %s35
      %s57 = sphi 0, %s59
      %s60 = sphi 0, %s57
      %s61 = sphi 0, %s60
      %s77 = sphi 0, %s61
      %s83 = sphi 0, %s85
      %s86 = sphi 0, %s83
      %s87 = sphi 0, %s86
      %s103 = sphi 0, %s87
      %s107 = sphi 0, %s107
      %s109 = sphi 0, %s107
      %s110 = sphi 0, %s109
      %s124 = sphi 0, %s110
      %s128 = sphi 0, %s128
      %s130 = sphi 0, %s128
      %s131 = sphi 0, %s130
      %s145 = sphi 0, %s131
      %s149 = sphi 0, %s149
      %s151 = sphi 0, %s149
      %s152 = sphi 0, %s151
      %s166 = sphi 0, %s152
      %s170 = sphi 0, %s170
      %s172 = sphi 0, %s170
      %s173 = sphi 0, %s172
      %s187 = sphi 0, %s173
      %s191 = sphi 0, %s191
      %s193 = sphi 0, %s191
      %s194 = sphi 0, %s193
      %s208 = sphi 0, %s194
      %s212 = sphi 0, %s212
      %s214 = sphi 0, %s212
      %s215 = sphi 0, %s214
      %s229 = sphi 0, %s215
      %s233 = sphi 0, %s233
      %s235 = sphi 0, %s233
      %s236 = sphi 0, %s235
      %s250 = sphi 0, %s236
      %s254 = sphi 0, %s254
      %s256 = sphi 0, %s254
      %s257 = sphi 0, %s256
      %s271 = sphi 0, %s257
      %s275 = sphi 0, %s275
      %s277 = sphi 0, %s275
      %s278 = sphi 0, %s277
      %s292 = sphi 0, %s278
      %s298 = sphi 0, %s300
      %s301 = sphi 0, %s298
      %s302 = sphi 0, %s301
      %s318 = sphi 0, %s302
    $region4: #{tpu_custom_call.1} parent=1 // loop_header_branch
      %24 = sbr.rel (%p22) target = $region8
    $region5: #{tpu_custom_call.1} parent=1 // loop_body
      %s26 = ssub.s32 %s21, 1
      %s27 = ssub.s32 %s21, 2
      %s28 = sadd.s32 %s21, 1
      %s29 = ssub.s32 %s21, %s28
      %p30 = scmp.eq.s32.totalorder %s29, 0
      %s32 = sadd.s32 %s31, 1
      %s33 = scalar_select %p30, %s31, %s32
      %p36 = pneg %p30
      %p37 = scmp.eq.s32.totalorder %s21, 1
      %p38 = por %p36, %p37
      %p39 = scmp.ne.s32.totalorder %s31, %s34
      %p40 = scmp.eq.s32.totalorder %s21, 0
      %p41 = por %p39, %p40
      %p42 = scmp.ne.s32.totalorder %s31, %s34
      %p43 = scmp.eq.s32.totalorder %s26, 1
      %p44 = por %p42, %p43
      %p45 = scmp.ne.s32.totalorder %s34, %s35
      %p46 = scmp.eq.s32.totalorder %s26, 0
      %p47 = por %p45, %p46
      %p48 = scmp.ne.s32.totalorder %s34, %s35
      %p49 = scmp.eq.s32.totalorder %s27, 1
      %p50 = por %p48, %p49
      %p52 = scmp.ne.s32.totalorder %s35, %s51
      %p53 = scmp.eq.s32.totalorder %s27, 0
      %p54 = por %p52, %p53
      %s55 = ssub.s32 %s21, %s28
      %p56 = scmp.eq.s32.totalorder %s55, 0
      %s58 = sadd.s32 %s57, 1
      %s59 = scalar_select %p56, %s57, %s58
      %p62 = pneg %p56
      %p63 = scmp.eq.s32.totalorder %s21, 1
      %p64 = por %p62, %p63
      %p65 = scmp.ne.s32.totalorder %s57, %s60
      %p66 = scmp.eq.s32.totalorder %s21, 0
      %p67 = por %p65, %p66
      %p68 = scmp.ne.s32.totalorder %s57, %s60
      %p69 = scmp.eq.s32.totalorder %s26, 1
      %p70 = por %p68, %p69
      %p71 = scmp.ne.s32.totalorder %s60, %s61
      %p72 = scmp.eq.s32.totalorder %s26, 0
      %p73 = por %p71, %p72
      %p74 = scmp.ne.s32.totalorder %s60, %s61
      %p75 = scmp.eq.s32.totalorder %s27, 1
      %p76 = por %p74, %p75
      %p78 = scmp.ne.s32.totalorder %s61, %s77
      %p79 = scmp.eq.s32.totalorder %s27, 0
      %p80 = por %p78, %p79
      %s81 = ssub.s32 %s21, %s28
      %p82 = scmp.eq.s32.totalorder %s81, 0
      %s84 = sadd.s32 %s83, 1
      %s85 = scalar_select %p82, %s83, %s84
      %p88 = pneg %p82
      %p89 = scmp.eq.s32.totalorder %s21, 1
      %p90 = por %p88, %p89
      %p91 = scmp.ne.s32.totalorder %s83, %s86
      %p92 = scmp.eq.s32.totalorder %s21, 0
      %p93 = por %p91, %p92
      %p94 = scmp.ne.s32.totalorder %s83, %s86
      %p95 = scmp.eq.s32.totalorder %s26, 1
      %p96 = por %p94, %p95
      %p97 = scmp.ne.s32.totalorder %s86, %s87
      %p98 = scmp.eq.s32.totalorder %s26, 0
      %p99 = por %p97, %p98
      %p100 = scmp.ne.s32.totalorder %s86, %s87
      %p101 = scmp.eq.s32.totalorder %s27, 1
      %p102 = por %p100, %p101
      %p104 = scmp.ne.s32.totalorder %s87, %s103
      %p105 = scmp.eq.s32.totalorder %s27, 0
      %p106 = por %p104, %p105
      %s108 = sadd.s32 %s107, 1
      %p111 = scmp.eq.s32.totalorder %s21, 1
      %p112 = scmp.ne.s32.totalorder %s107, %s109
      %p113 = scmp.eq.s32.totalorder %s21, 0
      %p114 = por %p112, %p113
      %p115 = scmp.ne.s32.totalorder %s107, %s109
      %p116 = scmp.eq.s32.totalorder %s26, 1
      %p117 = por %p115, %p116
      %p118 = scmp.ne.s32.totalorder %s109, %s110
      %p119 = scmp.eq.s32.totalorder %s26, 0
      %p120 = por %p118, %p119
      %p121 = scmp.ne.s32.totalorder %s109, %s110
      %p122 = scmp.eq.s32.totalorder %s27, 1
      %p123 = por %p121, %p122
      %p125 = scmp.ne.s32.totalorder %s110, %s124
      %p126 = scmp.eq.s32.totalorder %s27, 0
      %p127 = por %p125, %p126
      %s129 = sadd.s32 %s128, 1
      %p132 = scmp.eq.s32.totalorder %s21, 1
      %p133 = scmp.ne.s32.totalorder %s128, %s130
      %p134 = scmp.eq.s32.totalorder %s21, 0
      %p135 = por %p133, %p134
      %p136 = scmp.ne.s32.totalorder %s128, %s130
      %p137 = scmp.eq.s32.totalorder %s26, 1
      %p138 = por %p136, %p137
      %p139 = scmp.ne.s32.totalorder %s130, %s131
      %p140 = scmp.eq.s32.totalorder %s26, 0
      %p141 = por %p139, %p140
      %p142 = scmp.ne.s32.totalorder %s130, %s131
      %p143 = scmp.eq.s32.totalorder %s27, 1
      %p144 = por %p142, %p143
      %p146 = scmp.ne.s32.totalorder %s131, %s145
      %p147 = scmp.eq.s32.totalorder %s27, 0
      %p148 = por %p146, %p147
      %s150 = sadd.s32 %s149, 1
      %p153 = scmp.eq.s32.totalorder %s21, 1
      %p154 = scmp.ne.s32.totalorder %s149, %s151
      %p155 = scmp.eq.s32.totalorder %s21, 0
      %p156 = por %p154, %p155
      %p157 = scmp.ne.s32.totalorder %s149, %s151
      %p158 = scmp.eq.s32.totalorder %s26, 1
      %p159 = por %p157, %p158
      %p160 = scmp.ne.s32.totalorder %s151, %s152
      %p161 = scmp.eq.s32.totalorder %s26, 0
      %p162 = por %p160, %p161
      %p163 = scmp.ne.s32.totalorder %s151, %s152
      %p164 = scmp.eq.s32.totalorder %s27, 1
      %p165 = por %p163, %p164
      %p167 = scmp.ne.s32.totalorder %s152, %s166
      %p168 = scmp.eq.s32.totalorder %s27, 0
      %p169 = por %p167, %p168
      %s171 = sadd.s32 %s170, 1
      %p174 = scmp.eq.s32.totalorder %s21, 1
      %p175 = scmp.ne.s32.totalorder %s170, %s172
      %p176 = scmp.eq.s32.totalorder %s21, 0
      %p177 = por %p175, %p176
      %p178 = scmp.ne.s32.totalorder %s170, %s172
      %p179 = scmp.eq.s32.totalorder %s26, 1
      %p180 = por %p178, %p179
      %p181 = scmp.ne.s32.totalorder %s172, %s173
      %p182 = scmp.eq.s32.totalorder %s26, 0
      %p183 = por %p181, %p182
      %p184 = scmp.ne.s32.totalorder %s172, %s173
      %p185 = scmp.eq.s32.totalorder %s27, 1
      %p186 = por %p184, %p185
      %p188 = scmp.ne.s32.totalorder %s173, %s187
      %p189 = scmp.eq.s32.totalorder %s27, 0
      %p190 = por %p188, %p189
      %s192 = sadd.s32 %s191, 1
      %p195 = scmp.eq.s32.totalorder %s21, 1
      %p196 = scmp.ne.s32.totalorder %s191, %s193
      %p197 = scmp.eq.s32.totalorder %s21, 0
      %p198 = por %p196, %p197
      %p199 = scmp.ne.s32.totalorder %s191, %s193
      %p200 = scmp.eq.s32.totalorder %s26, 1
      %p201 = por %p199, %p200
      %p202 = scmp.ne.s32.totalorder %s193, %s194
      %p203 = scmp.eq.s32.totalorder %s26, 0
      %p204 = por %p202, %p203
      %p205 = scmp.ne.s32.totalorder %s193, %s194
      %p206 = scmp.eq.s32.totalorder %s27, 1
      %p207 = por %p205, %p206
      %p209 = scmp.ne.s32.totalorder %s194, %s208
      %p210 = scmp.eq.s32.totalorder %s27, 0
      %p211 = por %p209, %p210
      %s213 = sadd.s32 %s212, 1
      %p216 = scmp.eq.s32.totalorder %s21, 1
      %p217 = scmp.ne.s32.totalorder %s212, %s214
      %p218 = scmp.eq.s32.totalorder %s21, 0
      %p219 = por %p217, %p218
      %p220 = scmp.ne.s32.totalorder %s212, %s214
      %p221 = scmp.eq.s32.totalorder %s26, 1
      %p222 = por %p220, %p221
      %p223 = scmp.ne.s32.totalorder %s214, %s215
      %p224 = scmp.eq.s32.totalorder %s26, 0
      %p225 = por %p223, %p224
      %p226 = scmp.ne.s32.totalorder %s214, %s215
      %p227 = scmp.eq.s32.totalorder %s27, 1
      %p228 = por %p226, %p227
      %p230 = scmp.ne.s32.totalorder %s215, %s229
      %p231 = scmp.eq.s32.totalorder %s27, 0
      %p232 = por %p230, %p231
      %s234 = sadd.s32 %s233, 1
      %p237 = scmp.eq.s32.totalorder %s21, 1
      %p238 = scmp.ne.s32.totalorder %s233, %s235
      %p239 = scmp.eq.s32.totalorder %s21, 0
      %p240 = por %p238, %p239
      %p241 = scmp.ne.s32.totalorder %s233, %s235
      %p242 = scmp.eq.s32.totalorder %s26, 1
      %p243 = por %p241, %p242
      %p244 = scmp.ne.s32.totalorder %s235, %s236
      %p245 = scmp.eq.s32.totalorder %s26, 0
      %p246 = por %p244, %p245
      %p247 = scmp.ne.s32.totalorder %s235, %s236
      %p248 = scmp.eq.s32.totalorder %s27, 1
      %p249 = por %p247, %p248
      %p251 = scmp.ne.s32.totalorder %s236, %s250
      %p252 = scmp.eq.s32.totalorder %s27, 0
      %p253 = por %p251, %p252
      %s255 = sadd.s32 %s254, 1
      %p258 = scmp.eq.s32.totalorder %s21, 1
      %p259 = scmp.ne.s32.totalorder %s254, %s256
      %p260 = scmp.eq.s32.totalorder %s21, 0
      %p261 = por %p259, %p260
      %p262 = scmp.ne.s32.totalorder %s254, %s256
      %p263 = scmp.eq.s32.totalorder %s26, 1
      %p264 = por %p262, %p263
      %p265 = scmp.ne.s32.totalorder %s256, %s257
      %p266 = scmp.eq.s32.totalorder %s26, 0
      %p267 = por %p265, %p266
      %p268 = scmp.ne.s32.totalorder %s256, %s257
      %p269 = scmp.eq.s32.totalorder %s27, 1
      %p270 = por %p268, %p269
      %p272 = scmp.ne.s32.totalorder %s257, %s271
      %p273 = scmp.eq.s32.totalorder %s27, 0
      %p274 = por %p272, %p273
      %s276 = sadd.s32 %s275, 1
      %p279 = scmp.eq.s32.totalorder %s21, 1
      %p280 = scmp.ne.s32.totalorder %s275, %s277
      %p281 = scmp.eq.s32.totalorder %s21, 0
      %p282 = por %p280, %p281
      %p283 = scmp.ne.s32.totalorder %s275, %s277
      %p284 = scmp.eq.s32.totalorder %s26, 1
      %p285 = por %p283, %p284
      %p286 = scmp.ne.s32.totalorder %s277, %s278
      %p287 = scmp.eq.s32.totalorder %s26, 0
      %p288 = por %p286, %p287
      %p289 = scmp.ne.s32.totalorder %s277, %s278
      %p290 = scmp.eq.s32.totalorder %s27, 1
      %p291 = por %p289, %p290
      %p293 = scmp.ne.s32.totalorder %s278, %s292
      %p294 = scmp.eq.s32.totalorder %s27, 0
      %p295 = por %p293, %p294
      %s296 = ssub.s32 %s21, %s28
      %p297 = scmp.eq.s32.totalorder %s296, 0
      %s299 = sadd.s32 %s298, 1
      %s300 = scalar_select %p297, %s298, %s299
      %p303 = pneg %p297
      %p304 = scmp.eq.s32.totalorder %s21, 1
      %p305 = por %p303, %p304
      %p306 = scmp.ne.s32.totalorder %s298, %s301
      %p307 = scmp.eq.s32.totalorder %s21, 0
      %p308 = por %p306, %p307
      %p309 = scmp.ne.s32.totalorder %s298, %s301
      %p310 = scmp.eq.s32.totalorder %s26, 1
      %p311 = por %p309, %p310
      %p312 = scmp.ne.s32.totalorder %s301, %s302
      %p313 = scmp.eq.s32.totalorder %s26, 0
      %p314 = por %p312, %p313
      %p315 = scmp.ne.s32.totalorder %s301, %s302
      %p316 = scmp.eq.s32.totalorder %s27, 1
      %p317 = por %p315, %p316
      %p319 = scmp.ne.s32.totalorder %s302, %s318
      %p320 = scmp.eq.s32.totalorder %s27, 0
      %p321 = por %p319, %p320
      %p322 = scmp.le.s32.totalorder 1, %s21
      %p323 = scmp.lt.s32.totalorder %s21, 3
      %p324 = pnand %p322, %p323
      %p325 = pneg %p324
      // Predicated region
      $region9: #{tpu_custom_call.1} parent=5 // pred_check
        _
      $region10: #{tpu_custom_call.1} parent=5 // pred_check_branch
        %327 = sbr.rel (%p324) target = $region12
      $region11: #{tpu_custom_call.1} parent=5 // pred_region
        %s328 = ssub.s32 %s21, 1
        // Predicated region
        $region13: #{tpu_custom_call.1} parent=11 // pred_check
          %p329 = pneg %p120
        $region14: #{tpu_custom_call.1} parent=11 // pred_check_branch
          %331 = sbr.rel (%p329) target = $region16
        $region15: #{tpu_custom_call.1} parent=11 // pred_region
          _
        $region16: #{tpu_custom_call.1} parent=11 // pred_fallthru
          _
        // Predicated region
        $region17: #{tpu_custom_call.1} parent=11 // pred_check
          %p332 = pneg %p141
        $region18: #{tpu_custom_call.1} parent=11 // pred_check_branch
          %334 = sbr.rel (%p332) target = $region20
        $region19: #{tpu_custom_call.1} parent=11 // pred_region
          _
        $region20: #{tpu_custom_call.1} parent=11 // pred_fallthru
          _
        // Predicated region
        $region21: #{tpu_custom_call.1} parent=11 // pred_check
          %p335 = pneg %p162
        $region22: #{tpu_custom_call.1} parent=11 // pred_check_branch
          %337 = sbr.rel (%p335) target = $region24
        $region23: #{tpu_custom_call.1} parent=11 // pred_region
          _
        $region24: #{tpu_custom_call.1} parent=11 // pred_fallthru
          _
        // Predicated region
        $region25: #{tpu_custom_call.1} parent=11 // pred_check
          %p338 = pneg %p183
        $region26: #{tpu_custom_call.1} parent=11 // pred_check_branch
          %340 = sbr.rel (%p338) target = $region28
        $region27: #{tpu_custom_call.1} parent=11 // pred_region
          _
        $region28: #{tpu_custom_call.1} parent=11 // pred_fallthru
          _
        // Predicated region
        $region29: #{tpu_custom_call.1} parent=11 // pred_check
          %p341 = pneg %p204
        $region30: #{tpu_custom_call.1} parent=11 // pred_check_branch
          %343 = sbr.rel (%p341) target = $region32
        $region31: #{tpu_custom_call.1} parent=11 // pred_region
          _
        $region32: #{tpu_custom_call.1} parent=11 // pred_fallthru
          _
        // Predicated region
        $region33: #{tpu_custom_call.1} parent=11 // pred_check
          %p344 = pneg %p225
        $region34: #{tpu_custom_call.1} parent=11 // pred_check_branch
          %346 = sbr.rel (%p344) target = $region36
        $region35: #{tpu_custom_call.1} parent=11 // pred_region
          _
        $region36: #{tpu_custom_call.1} parent=11 // pred_fallthru
          _
        // Predicated region
        $region37: #{tpu_custom_call.1} parent=11 // pred_check
          %p347 = pneg %p246
        $region38: #{tpu_custom_call.1} parent=11 // pred_check_branch
          %349 = sbr.rel (%p347) target = $region40
        $region39: #{tpu_custom_call.1} parent=11 // pred_region
          _
        $region40: #{tpu_custom_call.1} parent=11 // pred_fallthru
          _
        // Predicated region
        $region41: #{tpu_custom_call.1} parent=11 // pred_check
          %p350 = pneg %p267
        $region42: #{tpu_custom_call.1} parent=11 // pred_check_branch
          %352 = sbr.rel (%p350) target = $region44
        $region43: #{tpu_custom_call.1} parent=11 // pred_region
          _
        $region44: #{tpu_custom_call.1} parent=11 // pred_fallthru
          _
        // Predicated region
        $region45: #{tpu_custom_call.1} parent=11 // pred_check
          %p353 = pneg %p288
        $region46: #{tpu_custom_call.1} parent=11 // pred_check_branch
          %355 = sbr.rel (%p353) target = $region48
        $region47: #{tpu_custom_call.1} parent=11 // pred_region
          _
        $region48: #{tpu_custom_call.1} parent=11 // pred_fallthru
          _
      $region12: #{tpu_custom_call.1} parent=5 // pred_fallthru
        _
      %p356 = scmp.lt.s32.totalorder %s21, 2
      // Predicated region
      $region49: #{tpu_custom_call.1} parent=5 // pred_check
        %p357 = pneg %p356
      $region50: #{tpu_custom_call.1} parent=5 // pred_check_branch
        %359 = sbr.rel (%p357) target = $region52
      $region51: #{tpu_custom_call.1} parent=5 // pred_region
        // Predicated region
        $region53: #{tpu_custom_call.1} parent=51 // pred_check
          %p360 = pneg %p41
        $region54: #{tpu_custom_call.1} parent=51 // pred_check_branch
          %362 = sbr.rel (%p360) target = $region56
        $region55: #{tpu_custom_call.1} parent=51 // pred_region
          %s363 = smul.u32 8, %s21
          %p364 = scmp.lt.s32.totalorder %s363, 15
          %s365 = scalar_select %p364, %s363, 15
          %s366 = smul.addr %s365, 4
          %s367 = scalar_lea.vmem %s0, %s366
          %s368 = smul.u32 8, %s21
        $region56: #{tpu_custom_call.1} parent=51 // pred_fallthru
          _
        // Predicated region
        $region57: #{tpu_custom_call.1} parent=51 // pred_check
          %p369 = pneg %p67
        $region58: #{tpu_custom_call.1} parent=51 // pred_check_branch
          %371 = sbr.rel (%p369) target = $region60
        $region59: #{tpu_custom_call.1} parent=51 // pred_region
          %p372 = scmp.lt.s32.totalorder %s21, 1
          %s373 = scalar_select %p372, %s21, 1
          %s374 = smul.addr %s373, 8
          %s375 = scalar_lea.vmem %s1, %s374
        $region60: #{tpu_custom_call.1} parent=51 // pred_fallthru
          _
        // Predicated region
        $region61: #{tpu_custom_call.1} parent=51 // pred_check
          %p376 = pneg %p93
        $region62: #{tpu_custom_call.1} parent=51 // pred_check_branch
          %378 = sbr.rel (%p376) target = $region64
        $region63: #{tpu_custom_call.1} parent=51 // pred_region
          %p379 = scmp.lt.s32.totalorder %s21, 1
          %s380 = scalar_select %p379, %s21, 1
          %s381 = smul.addr %s380, 8
          %s382 = scalar_lea.vmem %s2, %s381
        $region64: #{tpu_custom_call.1} parent=51 // pred_fallthru
          _
      $region52: #{tpu_custom_call.1} parent=5 // pred_fallthru
        _
      %p383 = scmp.le.s32.totalorder 1, %s21
      %p384 = scmp.lt.s32.totalorder %s21, 3
      %p385 = pnand %p383, %p384
      %p386 = pneg %p385
      // Predicated region
      $region65: #{tpu_custom_call.1} parent=5 // pred_check
        _
      $region66: #{tpu_custom_call.1} parent=5 // pred_check_branch
        %388 = sbr.rel (%p385) target = $region68
      $region67: #{tpu_custom_call.1} parent=5 // pred_region
        %s389 = ssub.s32 %s21, 1
        %s390 = smul.u32 8, %s26
        %p391 = scmp.lt.s32.totalorder %s390, 15
        %s392 = scalar_select %p391, %s390, 15
        %s393 = smul.addr %s392, 4
        %s394 = scalar_lea.vmem %s0, %s393
        %p395 = pneg %p47
        %p396 = pneg %p44
        %p397 = scmp.lt.s32.totalorder %s26, 1
        %s398 = scalar_select %p397, %s26, 1
        %s399 = smul.addr %s398, 8
        %s400 = scalar_lea.vmem %s1, %s399
        %p401 = pneg %p73
        %p402 = pneg %p70
        %p403 = scmp.lt.s32.totalorder %s26, 1
        %s404 = scalar_select %p403, %s26, 1
        %s405 = smul.addr %s404, 8
        %s406 = scalar_lea.vmem %s2, %s405
        %p407 = pneg %p99
        %p408 = pneg %p96
        %p409 = pneg %p120
        %p410 = pneg %p117
        %p411 = pneg %p141
        %p412 = pneg %p138
        %p413 = pneg %p162
        %p414 = pneg %p159
        %p415 = pneg %p183
        %p416 = pneg %p180
        %p417 = pneg %p204
        %p418 = pneg %p201
        %p419 = pneg %p225
        %p420 = pneg %p222
        %p421 = pneg %p246
        %p422 = pneg %p243
        %p423 = pneg %p267
        %p424 = pneg %p264
        %p425 = pneg %p288
        %p426 = pneg %p285
        %p427 = pneg %p314
        %p428 = pneg %p311
        %s429 = sand.u32 %s301, 1
        %s430 = scalar_lea.sflag [#allocation3], %s429
        %s431 = sand.u32 %s301, 1
        %s432 = smul.addr %s431, 8
        %s433 = scalar_lea.vmem [#allocation2], %s432
        %s434 = smul.u32 8, %s26
        %p435 = scmp.lt.s32.totalorder %s434, 15
        %s436 = scalar_select %p435, %s434, 15
        %s437 = smul.addr %s436, 4
        %s438 = scalar_lea.vmem %s0, %s437
        %s439 = smul.u32 8, %s26
        %p440 = scmp.lt.s32.totalorder %s26, 1
        %s441 = scalar_select %p440, %s26, 1
        %s442 = smul.addr %s441, 8
        %s443 = scalar_lea.vmem %s1, %s442
        %p444 = scmp.lt.s32.totalorder %s26, 1
        %s445 = scalar_select %p444, %s26, 1
        %s446 = smul.addr %s445, 8
        %s447 = scalar_lea.vmem %s2, %s446
        %v450 = vld [vmem:[%s438] sm:$0xf]
        %v451 = vld [vmem:[%s438 + $0x4] sm:$0xf]
        %v452 = vld [vmem:[%s438 + $0x8] sm:$0xf]
        %v453 = vld [vmem:[%s438 + $0xc] sm:$0xf]
        %v454 = vld [vmem:[%s438 + $0x10] sm:$0xf]
        %v455 = vld [vmem:[%s438 + $0x14] sm:$0xf]
        %v456 = vld [vmem:[%s438 + $0x18] sm:$0xf]
        %v457 = vld [vmem:[%s438 + $0x1c] sm:$0xf]
        %v458 = vld [vmem:[%s3] sm:$0xf]
        %v459 = vld [vmem:[%s3 + $0x4] sm:$0xf]
        %v460 = vld [vmem:[%s3 + $0x8] sm:$0xf]
        %v461 = vld [vmem:[%s3 + $0xc] sm:$0xf]
        %v462 = vld [vmem:[%s3 + $0x10] sm:$0xf]
        %v463 = vld [vmem:[%s3 + $0x14] sm:$0xf]
        %v464 = vld [vmem:[%s3 + $0x18] sm:$0xf]
        %v465 = vld [vmem:[%s3 + $0x1c] sm:$0xf]
        %v466 = vld [vmem:[%s4] sm:$0xf]
        %v467 = vld [vmem:[%s4 + $0x4] sm:$0xf]
        %v468 = vld [vmem:[%s4 + $0x8] sm:$0xf]
        %v469 = vld [vmem:[%s4 + $0xc] sm:$0xf]
        %v470 = vld [vmem:[%s4 + $0x10] sm:$0xf]
        %v471 = vld [vmem:[%s4 + $0x14] sm:$0xf]
        %v472 = vld [vmem:[%s4 + $0x18] sm:$0xf]
        %v473 = vld [vmem:[%s4 + $0x1c] sm:$0xf]
        %v474 = vld [vmem:[%s443] sm:$0xff]
        %v475 = vld [vmem:[%s5] sm:$0xff]
        %v476 = vld [vmem:[%s5 + $0x8] sm:$0xff]
        %v477 = vld [vmem:[%s5 + $0x10] sm:$0xff]
        %v478 = vld [vmem:[%s5 + $0x18] sm:$0xff]
        %v479 = vld [vmem:[%s6] sm:$0x1]
        %v481 = vlaneseq
        %v482 = vshrl.u32 %v481, 7
        %v483 = vsub.s32 0, %v482
        %v484 = vrot.slane %v479, %v483
        %vm486 = vcmask 261120
        %v488 = vsel %vm486, %v474, 0
        %490 = vmatprep.subr.mxu0 0.0
        %491 = vmatpush1.msra.mxu0 %v475
        %492 = vmatprep.subr.mxu0 0.0
        %493 = vmatpush1.msra.mxu0 %v476
        %494 = vmatprep.subr.mxu0 0.0
        %495 = vmatpush1.msra.mxu0 %v477
        %496 = vmatprep.subr.mxu0 0.0
        %497 = vmatpush1.msra.mxu0 %v478
        %498 = vmatprep.subr.mxu0 0.0
        %499 = vmatpush1.msra.mxu0 0.0
        %500 = vmatprep.subr.mxu0 0.0
        %501 = vmatpush1.msra.mxu0 0.0
        %502 = vmatprep.subr.mxu0 0.0
        %503 = vmatpush1.msra.mxu0 0.0
        %504 = vmatprep.subr.mxu0 0.0
        %505 = vmatpush1.msra.mxu0 0.0
        %506 = vmatprep.subr.mxu0 0.0
        %507 = vmatpush1.msra.mxu0 0.0
        %508 = vmatprep.subr.mxu0 0.0
        %509 = vmatpush1.msra.mxu0 0.0
        %510 = vmatprep.subr.mxu0 0.0
        %511 = vmatpush1.msra.mxu0 0.0
        %512 = vmatprep.subr.mxu0 0.0
        %513 = vmatpush1.msra.mxu0 0.0
        %514 = vmatprep.subr.mxu0 0.0
        %515 = vmatpush1.msra.mxu0 0.0
        %516 = vmatprep.subr.mxu0 0.0
        %517 = vmatpush1.msra.mxu0 0.0
        %518 = vmatprep.subr.mxu0 0.0
        %519 = vmatpush1.msra.mxu0 0.0
        %520 = vmatprep.subr.mxu0 0.0
        %521 = vmatpush1.msra.mxu0 0.0
        %522 = vmatprep.subr.mxu0 0.0
        %523 = vmatpush1.msra.mxu0 0.0
        %524 = vmatprep.subr.mxu0 0.0
        %525 = vmatpush1.msra.mxu0 0.0
        %526 = vmatprep.subr.mxu0 0.0
        %527 = vmatpush1.msra.mxu0 0.0
        %528 = vmatprep.subr.mxu0 0.0
        %529 = vmatpush1.msra.mxu0 0.0
        %530 = vmatprep.subr.mxu0 0.0
        %531 = vmatpush1.msra.mxu0 0.0
        %532 = vmatprep.subr.mxu0 0.0
        %533 = vmatpush1.msra.mxu0 0.0
        %534 = vmatprep.subr.mxu0 0.0
        %535 = vmatpush1.msra.mxu0 0.0
        %536 = vmatprep.subr.mxu0 0.0
        %537 = vmatpush1.msra.mxu0 0.0
        %538 = vmatprep.subr.mxu0 0.0
        %539 = vmatpush1.msra.mxu0 0.0
        %540 = vmatprep.subr.mxu0 0.0
        %541 = vmatpush1.msra.mxu0 0.0
        %542 = vmatprep.subr.mxu0 0.0
        %543 = vmatpush1.msra.mxu0 0.0
        %544 = vmatprep.subr.mxu0 0.0
        %545 = vmatpush1.msra.mxu0 0.0
        %546 = vmatprep.subr.mxu0 0.0
        %547 = vmatpush1.msra.mxu0 0.0
        %548 = vmatprep.subr.mxu0 0.0
        %549 = vmatpush1.msra.mxu0 0.0
        %550 = vmatprep.subr.mxu0 0.0
        %551 = vmatpush1.msra.mxu0 0.0
        %552 = vmatprep.subr.mxu0 0.0
        %553 = vmatpush1.msra.mxu0 0.0
        %554 = vmatprep.mubr.f32.mxu0 0.0
        %555 = vmatmul.mubr.f32.gmra.mrb[0].mxu0 %v488
        %v556 = vpop.f32.mrb[0].mxu0
        %v557 = vadd.f32 %v484, %v556
        %v558 = vpop.f32.mrb[0].mxu0
        %559 = vdwg.mxu0
        %v560 = vmax.f32 %v557, 0.0
        %v561 = vld [vmem:[%s8] sm:$0xff]
        %v562 = vld [vmem:[%s8 + $0x8] sm:$0xff]
        %v563 = vld [vmem:[%s9] sm:$0x1]
        %v565 = vlaneseq
        %v566 = vshrl.u32 %v565, 7
        %v567 = vsub.s32 0, %v566
        %v568 = vrot.slane %v563, %v567
        %vm570 = vcmask 130048
        %v572 = vsel %vm570, %v560, 0
        %574 = vmatprep.subr.mxu0 0.0
        %575 = vmatpush1.msra.mxu0 %v561
        %576 = vmatprep.subr.mxu0 0.0
        %577 = vmatpush1.msra.mxu0 %v562
        %578 = vmatprep.subr.mxu0 0.0
        %579 = vmatpush1.msra.mxu0 0.0
        %580 = vmatprep.subr.mxu0 0.0
        %581 = vmatpush1.msra.mxu0 0.0
        %582 = vmatprep.subr.mxu0 0.0
        %583 = vmatpush1.msra.mxu0 0.0
        %584 = vmatprep.subr.mxu0 0.0
        %585 = vmatpush1.msra.mxu0 0.0
        %586 = vmatprep.subr.mxu0 0.0
        %587 = vmatpush1.msra.mxu0 0.0
        %588 = vmatprep.subr.mxu0 0.0
        %589 = vmatpush1.msra.mxu0 0.0
        %590 = vmatprep.subr.mxu0 0.0
        %591 = vmatpush1.msra.mxu0 0.0
        %592 = vmatprep.subr.mxu0 0.0
        %593 = vmatpush1.msra.mxu0 0.0
        %594 = vmatprep.subr.mxu0 0.0
        %595 = vmatpush1.msra.mxu0 0.0
        %596 = vmatprep.subr.mxu0 0.0
        %597 = vmatpush1.msra.mxu0 0.0
        %598 = vmatprep.subr.mxu0 0.0
        %599 = vmatpush1.msra.mxu0 0.0
        %600 = vmatprep.subr.mxu0 0.0
        %601 = vmatpush1.msra.mxu0 0.0
        %602 = vmatprep.subr.mxu0 0.0
        %603 = vmatpush1.msra.mxu0 0.0
        %604 = vmatprep.subr.mxu0 0.0
        %605 = vmatpush1.msra.mxu0 0.0
        %606 = vmatprep.subr.mxu0 0.0
        %607 = vmatpush1.msra.mxu0 0.0
        %608 = vmatprep.subr.mxu0 0.0
        %609 = vmatpush1.msra.mxu0 0.0
        %610 = vmatprep.subr.mxu0 0.0
        %611 = vmatpush1.msra.mxu0 0.0
        %612 = vmatprep.subr.mxu0 0.0
        %613 = vmatpush1.msra.mxu0 0.0
        %614 = vmatprep.subr.mxu0 0.0
        %615 = vmatpush1.msra.mxu0 0.0
        %616 = vmatprep.subr.mxu0 0.0
        %617 = vmatpush1.msra.mxu0 0.0
        %618 = vmatprep.subr.mxu0 0.0
        %619 = vmatpush1.msra.mxu0 0.0
        %620 = vmatprep.subr.mxu0 0.0
        %621 = vmatpush1.msra.mxu0 0.0
        %622 = vmatprep.subr.mxu0 0.0
        %623 = vmatpush1.msra.mxu0 0.0
        %624 = vmatprep.subr.mxu0 0.0
        %625 = vmatpush1.msra.mxu0 0.0
        %626 = vmatprep.subr.mxu0 0.0
        %627 = vmatpush1.msra.mxu0 0.0
        %628 = vmatprep.subr.mxu0 0.0
        %629 = vmatpush1.msra.mxu0 0.0
        %630 = vmatprep.subr.mxu0 0.0
        %631 = vmatpush1.msra.mxu0 0.0
        %632 = vmatprep.subr.mxu0 0.0
        %633 = vmatpush1.msra.mxu0 0.0
        %634 = vmatprep.subr.mxu0 0.0
        %635 = vmatpush1.msra.mxu0 0.0
        %636 = vmatprep.subr.mxu0 0.0
        %637 = vmatpush1.msra.mxu0 0.0
        %638 = vmatprep.mubr.f32.mxu0 0.0
        %639 = vmatmul.mubr.f32.gmra.mrb[0].mxu0 %v572
        %v640 = vpop.f32.mrb[0].mxu0
        %v641 = vadd.f32 %v568, %v640
        %v642 = vpop.f32.mrb[0].mxu0
        %643 = vdwg.mxu0
        %v644 = vpack.c.bf16 %v641, %v641
        %v653 = vunpack.c.l.b16 %v458
        %v654 = vunpack.c.l.b16 %v459
        %v655 = vunpack.c.l.b16 %v460
        %v656 = vunpack.c.l.b16 %v461
        %v657 = vunpack.c.l.b16 %v462
        %v658 = vunpack.c.l.b16 %v463
        %v659 = vunpack.c.l.b16 %v464
        %v660 = vunpack.c.l.b16 %v465
        %v661 = vpack.c.b16 %v654, %v653
        %v662 = vpack.c.b16 %v656, %v655
        %v663 = vpack.c.b16 %v658, %v657
        %v664 = vpack.c.b16 %v660, %v659
        %vm665 = vcmask 64512
        %v667 = vsel %vm665, %v661, 0
        %v670 = vsel %vm665, %v662, 0
        %v673 = vsel %vm665, %v663, 0
        %v676 = vsel %vm665, %v664, 0
        %vm678 = vcmask 1043456
        %v680 = vsel %vm678, %v644, 0
        %682 = vmatprep.subr.bf16.mxu0 0
        %683 = vmatpush1.bf16.msra.mxu0 %v680
        %684 = vmatprep.subr.bf16.mxu0 0
        %685 = vmatpush1.bf16.msra.mxu0 0
        %686 = vmatprep.subr.bf16.mxu0 0
        %687 = vmatpush1.bf16.msra.mxu0 0
        %688 = vmatprep.subr.bf16.mxu0 0
        %689 = vmatpush1.bf16.msra.mxu0 0
        %690 = vmatprep.subr.bf16.mxu0 0
        %691 = vmatpush1.bf16.msra.mxu0 0
        %692 = vmatprep.subr.bf16.mxu0 0
        %693 = vmatpush1.bf16.msra.mxu0 0
        %694 = vmatprep.subr.bf16.mxu0 0
        %695 = vmatpush1.bf16.msra.mxu0 0
        %696 = vmatprep.subr.bf16.mxu0 0
        %697 = vmatpush1.bf16.msra.mxu0 0
        %698 = vmatprep.subr.bf16.mxu0 0
        %699 = vmatpush1.bf16.msra.mxu0 0
        %700 = vmatprep.subr.bf16.mxu0 0
        %701 = vmatpush1.bf16.msra.mxu0 0
        %702 = vmatprep.subr.bf16.mxu0 0
        %703 = vmatpush1.bf16.msra.mxu0 0
        %704 = vmatprep.subr.bf16.mxu0 0
        %705 = vmatpush1.bf16.msra.mxu0 0
        %706 = vmatprep.subr.bf16.mxu0 0
        %707 = vmatpush1.bf16.msra.mxu0 0
        %708 = vmatprep.subr.bf16.mxu0 0
        %709 = vmatpush1.bf16.msra.mxu0 0
        %710 = vmatprep.subr.bf16.mxu0 0
        %711 = vmatpush1.bf16.msra.mxu0 0
        %712 = vmatprep.subr.bf16.mxu0 0
        %713 = vmatpush1.bf16.msra.mxu0 0
        %714 = vmatprep.mubr.bf16.mxu0 0
        %715 = vmatmul.mubr.bf16.gmra.mrb[0].mxu0 %v667
        %v716 = vpop.f32.mrb[0].mxu0
        %v717 = vadd.f32 0.0, %v716
        %v718 = vpop.f32.mrb[0].mxu0
        %v719 = vpop.f32.mrb[0].mxu0
        %v720 = vadd.f32 0.0, %v719
        %v721 = vpop.f32.mrb[0].mxu0
        %722 = vmatprep.mubr.bf16.mxu0 0
        %723 = vmatmul.mubr.bf16.gmra.mrb[0].mxu0 %v670
        %v724 = vpop.f32.mrb[0].mxu0
        %v725 = vadd.f32 0.0, %v724
        %v726 = vpop.f32.mrb[0].mxu0
        %v727 = vpop.f32.mrb[0].mxu0
        %v728 = vadd.f32 0.0, %v727
        %v729 = vpop.f32.mrb[0].mxu0
        %730 = vmatprep.mubr.bf16.mxu0 0
        %731 = vmatmul.mubr.bf16.gmra.mrb[0].mxu0 %v673
        %v732 = vpop.f32.mrb[0].mxu0
        %v733 = vadd.f32 0.0, %v732
        %v734 = vpop.f32.mrb[0].mxu0
        %v735 = vpop.f32.mrb[0].mxu0
        %v736 = vadd.f32 0.0, %v735
        %v737 = vpop.f32.mrb[0].mxu0
        %738 = vmatprep.mubr.bf16.mxu0 0
        %739 = vmatmul.mubr.bf16.gmra.mrb[0].mxu0 %v676
        %v740 = vpop.f32.mrb[0].mxu0
        %v741 = vadd.f32 0.0, %v740
        %v742 = vpop.f32.mrb[0].mxu0
        %v743 = vpop.f32.mrb[0].mxu0
        %v744 = vadd.f32 0.0, %v743
        %v745 = vpop.f32.mrb[0].mxu0
        %746 = vdwg.mxu0
        %v747 = vld [vmem:[%s7] sm:$0xf]
        %v748 = vld [vmem:[%s7 + $0x4] sm:$0xf]
        %v749 = vld [vmem:[%s7 + $0x8] sm:$0xf]
        %v750 = vld [vmem:[%s7 + $0xc] sm:$0xf]
        %v759 = vunpack.c.l.b16 %v450
        %v760 = vunpack.c.l.b16 %v451
        %v761 = vunpack.c.l.b16 %v452
        %v762 = vunpack.c.l.b16 %v453
        %v763 = vunpack.c.l.b16 %v454
        %v764 = vunpack.c.l.b16 %v455
        %v765 = vunpack.c.l.b16 %v456
        %v766 = vunpack.c.l.b16 %v457
        %v767 = vpack.c.b16 %v760, %v759
        %v768 = vpack.c.b16 %v762, %v761
        %v769 = vpack.c.b16 %v764, %v763
        %v770 = vpack.c.b16 %v766, %v765
        %v775 = vunpack.c.l.b16 %v747
        %v776 = vunpack.c.l.b16 %v748
        %v777 = vunpack.c.l.b16 %v749
        %v778 = vunpack.c.l.b16 %v750
        %v779 = vpack.c.b16 %v776, %v775
        %v780 = vpack.c.b16 %v778, %v777
        %v784 = vsel %vm486, %v767, 0
        %v787 = vsel %vm486, %v768, 0
        %v790 = vsel %vm486, %v769, 0
        %v793 = vsel %vm486, %v770, 0
        %795 = vmatprep.subr.bf16.mxu0 0
        %796 = vmatpush1.bf16.msra.mxu0 %v779
        %797 = vmatprep.subr.bf16.mxu0 0
        %798 = vmatpush1.bf16.msra.mxu0 %v780
        %799 = vmatprep.subr.bf16.mxu0 0
        %800 = vmatpush1.bf16.msra.mxu0 0
        %801 = vmatprep.subr.bf16.mxu0 0
        %802 = vmatpush1.bf16.msra.mxu0 0
        %803 = vmatprep.subr.bf16.mxu0 0
        %804 = vmatpush1.bf16.msra.mxu0 0
        %805 = vmatprep.subr.bf16.mxu0 0
        %806 = vmatpush1.bf16.msra.mxu0 0
        %807 = vmatprep.subr.bf16.mxu0 0
        %808 = vmatpush1.bf16.msra.mxu0 0
        %809 = vmatprep.subr.bf16.mxu0 0
        %810 = vmatpush1.bf16.msra.mxu0 0
        %811 = vmatprep.subr.bf16.mxu0 0
        %812 = vmatpush1.bf16.msra.mxu0 0
        %813 = vmatprep.subr.bf16.mxu0 0
        %814 = vmatpush1.bf16.msra.mxu0 0
        %815 = vmatprep.subr.bf16.mxu0 0
        %816 = vmatpush1.bf16.msra.mxu0 0
        %817 = vmatprep.subr.bf16.mxu0 0
        %818 = vmatpush1.bf16.msra.mxu0 0
        %819 = vmatprep.subr.bf16.mxu0 0
        %820 = vmatpush1.bf16.msra.mxu0 0
        %821 = vmatprep.subr.bf16.mxu0 0
        %822 = vmatpush1.bf16.msra.mxu0 0
        %823 = vmatprep.subr.bf16.mxu0 0
        %824 = vmatpush1.bf16.msra.mxu0 0
        %825 = vmatprep.subr.bf16.mxu0 0
        %826 = vmatpush1.bf16.msra.mxu0 0
        %827 = vmatprep.mubr.bf16.mxu0 0
        %828 = vmatmul.mubr.bf16.gmra.mrb[0].mxu0 %v784
        %v829 = vpop.f32.mrb[0].mxu0
        %v830 = vadd.f32 %v717, %v829
        %v831 = vpop.f32.mrb[0].mxu0
        %v832 = vpop.f32.mrb[0].mxu0
        %v833 = vadd.f32 %v720, %v832
        %v834 = vpop.f32.mrb[0].mxu0
        %835 = vmatprep.mubr.bf16.mxu0 0
        %836 = vmatmul.mubr.bf16.gmra.mrb[0].mxu0 %v787
        %v837 = vpop.f32.mrb[0].mxu0
        %v838 = vadd.f32 %v725, %v837
        %v839 = vpop.f32.mrb[0].mxu0
        %v840 = vpop.f32.mrb[0].mxu0
        %v841 = vadd.f32 %v728, %v840
        %v842 = vpop.f32.mrb[0].mxu0
        %843 = vmatprep.mubr.bf16.mxu0 0
        %844 = vmatmul.mubr.bf16.gmra.mrb[0].mxu0 %v790
        %v845 = vpop.f32.mrb[0].mxu0
        %v846 = vadd.f32 %v733, %v845
        %v847 = vpop.f32.mrb[0].mxu0
        %v848 = vpop.f32.mrb[0].mxu0
        %v849 = vadd.f32 %v736, %v848
        %v850 = vpop.f32.mrb[0].mxu0
        %851 = vmatprep.mubr.bf16.mxu0 0
        %852 = vmatmul.mubr.bf16.gmra.mrb[0].mxu0 %v793
        %v853 = vpop.f32.mrb[0].mxu0
        %v854 = vadd.f32 %v741, %v853
        %v855 = vpop.f32.mrb[0].mxu0
        %v856 = vpop.f32.mrb[0].mxu0
        %v857 = vadd.f32 %v744, %v856
        %v858 = vpop.f32.mrb[0].mxu0
        %859 = vdwg.mxu0
        %v860 = vtanh.pop %v830
        %v861 = vtanh.pop %v833
        %v862 = vtanh.pop %v838
        %v863 = vtanh.pop %v841
        %v864 = vtanh.pop %v846
        %v865 = vtanh.pop %v849
        %v866 = vtanh.pop %v854
        %v867 = vtanh.pop %v857
        %v868 = vld [vmem:[%s10] sm:$0xff]
        %v869 = vld [vmem:[%s10 + $0x8] sm:$0xff]
        %v871 = vsel %vm570, %v860, 0
        %v874 = vsel %vm570, %v861, 0
        %v877 = vsel %vm570, %v862, 0
        %v880 = vsel %vm570, %v863, 0
        %v883 = vsel %vm570, %v864, 0
        %v886 = vsel %vm570, %v865, 0
        %v889 = vsel %vm570, %v866, 0
        %v892 = vsel %vm570, %v867, 0
        %894 = vmatprep.subr.mxu0 0.0
        %895 = vmatpush1.msra.mxu0 %v868
        %896 = vmatprep.subr.mxu0 0.0
        %897 = vmatpush1.msra.mxu0 %v869
        %898 = vmatprep.subr.mxu0 0.0
        %899 = vmatpush1.msra.mxu0 0.0
        %900 = vmatprep.subr.mxu0 0.0
        %901 = vmatpush1.msra.mxu0 0.0
        %902 = vmatprep.subr.mxu0 0.0
        %903 = vmatpush1.msra.mxu0 0.0
        %904 = vmatprep.subr.mxu0 0.0
        %905 = vmatpush1.msra.mxu0 0.0
        %906 = vmatprep.subr.mxu0 0.0
        %907 = vmatpush1.msra.mxu0 0.0
        %908 = vmatprep.subr.mxu0 0.0
        %909 = vmatpush1.msra.mxu0 0.0
        %910 = vmatprep.subr.mxu0 0.0
        %911 = vmatpush1.msra.mxu0 0.0
        %912 = vmatprep.subr.mxu0 0.0
        %913 = vmatpush1.msra.mxu0 0.0
        %914 = vmatprep.subr.mxu0 0.0
        %915 = vmatpush1.msra.mxu0 0.0
        %916 = vmatprep.subr.mxu0 0.0
        %917 = vmatpush1.msra.mxu0 0.0
        %918 = vmatprep.subr.mxu0 0.0
        %919 = vmatpush1.msra.mxu0 0.0
        %920 = vmatprep.subr.mxu0 0.0
        %921 = vmatpush1.msra.mxu0 0.0
        %922 = vmatprep.subr.mxu0 0.0
        %923 = vmatpush1.msra.mxu0 0.0
        %924 = vmatprep.subr.mxu0 0.0
        %925 = vmatpush1.msra.mxu0 0.0
        %926 = vmatprep.subr.mxu0 0.0
        %927 = vmatpush1.msra.mxu0 0.0
        %928 = vmatprep.subr.mxu0 0.0
        %929 = vmatpush1.msra.mxu0 0.0
        %930 = vmatprep.subr.mxu0 0.0
        %931 = vmatpush1.msra.mxu0 0.0
        %932 = vmatprep.subr.mxu0 0.0
        %933 = vmatpush1.msra.mxu0 0.0
        %934 = vmatprep.subr.mxu0 0.0
        %935 = vmatpush1.msra.mxu0 0.0
        %936 = vmatprep.subr.mxu0 0.0
        %937 = vmatpush1.msra.mxu0 0.0
        %938 = vmatprep.subr.mxu0 0.0
        %939 = vmatpush1.msra.mxu0 0.0
        %940 = vmatprep.subr.mxu0 0.0
        %941 = vmatpush1.msra.mxu0 0.0
        %942 = vmatprep.subr.mxu0 0.0
        %943 = vmatpush1.msra.mxu0 0.0
        %944 = vmatprep.subr.mxu0 0.0
        %945 = vmatpush1.msra.mxu0 0.0
        %946 = vmatprep.subr.mxu0 0.0
        %947 = vmatpush1.msra.mxu0 0.0
        %948 = vmatprep.subr.mxu0 0.0
        %949 = vmatpush1.msra.mxu0 0.0
        %950 = vmatprep.subr.mxu0 0.0
        %951 = vmatpush1.msra.mxu0 0.0
        %952 = vmatprep.subr.mxu0 0.0
        %953 = vmatpush1.msra.mxu0 0.0
        %954 = vmatprep.subr.mxu0 0.0
        %955 = vmatpush1.msra.mxu0 0.0
        %956 = vmatprep.subr.mxu0 0.0
        %957 = vmatpush1.msra.mxu0 0.0
        %958 = vmatprep.mubr.f32.mxu0 0.0
        %959 = vmatmul.mubr.f32.gmra.mrb[0].mxu0 %v871
        %v960 = vpop.f32.mrb[0].mxu0
        %v961 = vadd.f32 0.0, %v960
        %v962 = vpop.f32.mrb[0].mxu0
        %963 = vmatprep.mubr.f32.mxu0 0.0
        %964 = vmatmul.mubr.f32.gmra.mrb[0].mxu0 %v874
        %v965 = vpop.f32.mrb[0].mxu0
        %v966 = vadd.f32 0.0, %v965
        %v967 = vpop.f32.mrb[0].mxu0
        %968 = vmatprep.mubr.f32.mxu0 0.0
        %969 = vmatmul.mubr.f32.gmra.mrb[0].mxu0 %v877
        %v970 = vpop.f32.mrb[0].mxu0
        %v971 = vadd.f32 0.0, %v970
        %v972 = vpop.f32.mrb[0].mxu0
        %973 = vmatprep.mubr.f32.mxu0 0.0
        %974 = vmatmul.mubr.f32.gmra.mrb[0].mxu0 %v880
        %v975 = vpop.f32.mrb[0].mxu0
        %v976 = vadd.f32 0.0, %v975
        %v977 = vpop.f32.mrb[0].mxu0
        %978 = vmatprep.mubr.f32.mxu0 0.0
        %979 = vmatmul.mubr.f32.gmra.mrb[0].mxu0 %v883
        %v980 = vpop.f32.mrb[0].mxu0
        %v981 = vadd.f32 0.0, %v980
        %v982 = vpop.f32.mrb[0].mxu0
        %983 = vmatprep.mubr.f32.mxu0 0.0
        %984 = vmatmul.mubr.f32.gmra.mrb[0].mxu0 %v886
        %v985 = vpop.f32.mrb[0].mxu0
        %v986 = vadd.f32 0.0, %v985
        %v987 = vpop.f32.mrb[0].mxu0
        %988 = vmatprep.mubr.f32.mxu0 0.0
        %989 = vmatmul.mubr.f32.gmra.mrb[0].mxu0 %v889
        %v990 = vpop.f32.mrb[0].mxu0
        %v991 = vadd.f32 0.0, %v990
        %v992 = vpop.f32.mrb[0].mxu0
        %993 = vmatprep.mubr.f32.mxu0 0.0
        %994 = vmatmul.mubr.f32.gmra.mrb[0].mxu0 %v892
        %v995 = vpop.f32.mrb[0].mxu0
        %v996 = vadd.f32 0.0, %v995
        %v997 = vpop.f32.mrb[0].mxu0
        %998 = vdwg.mxu0
        %vm999 = vcmask 7168
        %v1000 = vsel %vm999, %v961, -inf
        %v1001 = vsel %vm999, %v966, -inf
        %v1002 = vsel %vm999, %v971, -inf
        %v1003 = vsel %vm999, %v976, -inf
        %v1004 = vsel %vm999, %v981, -inf
        %v1005 = vmax.f32 %v1000, %v1004
        %v1006 = vsel %vm999, %v986, -inf
        %v1007 = vmax.f32 %v1001, %v1006
        %v1008 = vsel %vm999, %v991, -inf
        %v1009 = vmax.f32 %v1002, %v1008
        %v1010 = vsel %vm999, %v996, -inf
        %v1011 = vmax.f32 %v1003, %v1010
        %v1012 = vmax.f32 %v1005, %v1007
        %v1013 = vmax.f32 %v1009, %v1011
        %v1014 = vmax.f32 %v1012, %v1013
        %v1015 = vrot.slane %v1014, 4
        %v1016 = vmax.f32 %v1014, %v1015
        %v1017 = vrot.slane %v1016, 2
        %v1018 = vmax.f32 %v1016, %v1017
        %v1019 = vrot.slane %v1018, 1
        %v1020 = vmax.f32 %v1018, %v1019
        %v1021 = vsub.f32 %v961, %v1020
        %v1022 = vsub.f32 %v966, %v1020
        %v1023 = vsub.f32 %v971, %v1020
        %v1024 = vsub.f32 %v976, %v1020
        %v1025 = vsub.f32 %v981, %v1020
        %v1026 = vsub.f32 %v986, %v1020
        %v1027 = vsub.f32 %v991, %v1020
        %v1028 = vsub.f32 %v996, %v1020
        %v1029 = vmul.f32 %v1021, 1.442695
        %v1030 = vpow.pop %v1029
        %v1031 = vmul.f32 %v1022, 1.442695
        %v1032 = vpow.pop %v1031
        %v1033 = vmul.f32 %v1023, 1.442695
        %v1034 = vpow.pop %v1033
        %v1035 = vmul.f32 %v1024, 1.442695
        %v1036 = vpow.pop %v1035
        %v1037 = vmul.f32 %v1025, 1.442695
        %v1038 = vpow.pop %v1037
        %v1039 = vmul.f32 %v1026, 1.442695
        %v1040 = vpow.pop %v1039
        %v1041 = vmul.f32 %v1027, 1.442695
        %v1042 = vpow.pop %v1041
        %v1043 = vmul.f32 %v1028, 1.442695
        %v1044 = vpow.pop %v1043
        %v1045 = vld [vmem:[%s447] sm:$0xff]
        %v1046 = vpack.c.bf16 %v1045, %v1045
        %v1055 = vunpack.c.l.b16 %v466
        %v1056 = vunpack.c.l.b16 %v467
        %v1057 = vunpack.c.l.b16 %v468
        %v1058 = vunpack.c.l.b16 %v469
        %v1059 = vunpack.c.l.b16 %v470
        %v1060 = vunpack.c.l.b16 %v471
        %v1061 = vunpack.c.l.b16 %v472
        %v1062 = vunpack.c.l.b16 %v473
        %v1063 = vpack.c.b16 %v1056, %v1055
        %v1064 = vpack.c.b16 %v1058, %v1057
        %v1065 = vpack.c.b16 %v1060, %v1059
        %v1066 = vpack.c.b16 %v1062, %v1061
        %v1068 = vsel %vm665, %v1063, 0
        %v1071 = vsel %vm665, %v1064, 0
        %v1074 = vsel %vm665, %v1065, 0
        %v1077 = vsel %vm665, %v1066, 0
        %v1080 = vsel %vm665, %v1046, 0
        %1082 = vmatprep.subr.bf16.mxu0 0
        %1083 = vmatpush1.bf16.xpose.msra.mxu0 %v1080
        %1084 = vmatprep.subr.bf16.mxu0 0
        %1085 = vmatpush1.bf16.xpose.msra.mxu0 0
        %1086 = vmatprep.subr.bf16.mxu0 0
        %1087 = vmatpush1.bf16.xpose.msra.mxu0 0
        %1088 = vmatprep.subr.bf16.mxu0 0
        %1089 = vmatpush1.bf16.xpose.msra.mxu0 0
        %1090 = vmatprep.subr.bf16.mxu0 0
        %1091 = vmatpush1.bf16.xpose.msra.mxu0 0
        %1092 = vmatprep.subr.bf16.mxu0 0
        %1093 = vmatpush1.bf16.xpose.msra.mxu0 0
        %1094 = vmatprep.subr.bf16.mxu0 0
        %1095 = vmatpush1.bf16.xpose.msra.mxu0 0
        %1096 = vmatprep.subr.bf16.mxu0 0
        %1097 = vmatpush1.bf16.xpose.msra.mxu0 0
        %1098 = vmatprep.subr.bf16.mxu0 0
        %1099 = vmatpush1.bf16.xpose.msra.mxu0 0
        %1100 = vmatprep.subr.bf16.mxu0 0
        %1101 = vmatpush1.bf16.xpose.msra.mxu0 0
        %1102 = vmatprep.subr.bf16.mxu0 0
        %1103 = vmatpush1.bf16.xpose.msra.mxu0 0
        %1104 = vmatprep.subr.bf16.mxu0 0
        %1105 = vmatpush1.bf16.xpose.msra.mxu0 0
        %1106 = vmatprep.subr.bf16.mxu0 0
        %1107 = vmatpush1.bf16.xpose.msra.mxu0 0
        %1108 = vmatprep.subr.bf16.mxu0 0
        %1109 = vmatpush1.bf16.xpose.msra.mxu0 0
        %1110 = vmatprep.subr.bf16.mxu0 0
        %1111 = vmatpush1.bf16.xpose.msra.mxu0 0
        %1112 = vmatprep.subr.bf16.mxu0 0
        %1113 = vmatpush1.bf16.xpose.msra.mxu0 0
        %1114 = vmatprep.mubr.bf16.mxu0 0
        %1115 = vmatmul.mubr.bf16.gmra.mrb[0].mxu0 %v1068
        %v1116 = vpop.f32.mrb[0].mxu0
        %v1117 = vadd.f32 0.0, %v1116
        %v1118 = vpop.f32.mrb[0].mxu0
        %v1119 = vpop.f32.mrb[0].mxu0
        %v1120 = vadd.f32 0.0, %v1119
        %v1121 = vpop.f32.mrb[0].mxu0
        %1122 = vmatprep.mubr.bf16.mxu0 0
        %1123 = vmatmul.mubr.bf16.gmra.mrb[0].mxu0 %v1071
        %v1124 = vpop.f32.mrb[0].mxu0
        %v1125 = vadd.f32 0.0, %v1124
        %v1126 = vpop.f32.mrb[0].mxu0
        %v1127 = vpop.f32.mrb[0].mxu0
        %v1128 = vadd.f32 0.0, %v1127
        %v1129 = vpop.f32.mrb[0].mxu0
        %1130 = vmatprep.mubr.bf16.mxu0 0
        %1131 = vmatmul.mubr.bf16.gmra.mrb[0].mxu0 %v1074
        %v1132 = vpop.f32.mrb[0].mxu0
        %v1133 = vadd.f32 0.0, %v1132
        %v1134 = vpop.f32.mrb[0].mxu0
        %v1135 = vpop.f32.mrb[0].mxu0
        %v1136 = vadd.f32 0.0, %v1135
        %v1137 = vpop.f32.mrb[0].mxu0
        %1138 = vmatprep.mubr.bf16.mxu0 0
        %1139 = vmatmul.mubr.bf16.gmra.mrb[0].mxu0 %v1077
        %v1140 = vpop.f32.mrb[0].mxu0
        %v1141 = vadd.f32 0.0, %v1140
        %v1142 = vpop.f32.mrb[0].mxu0
        %v1143 = vpop.f32.mrb[0].mxu0
        %v1144 = vadd.f32 0.0, %v1143
        %v1145 = vpop.f32.mrb[0].mxu0
        %1146 = vdwg.mxu0
        %v1147 = vunpack.c.l.bf16 %v458
        %v1148 = vunpack.c.l.bf16 %v459
        %v1149 = vunpack.c.l.bf16 %v460
        %v1150 = vunpack.c.l.bf16 %v461
        %v1151 = vunpack.c.l.bf16 %v462
        %v1152 = vunpack.c.l.bf16 %v463
        %v1153 = vunpack.c.l.bf16 %v464
        %v1154 = vunpack.c.l.bf16 %v465
        %v1155 = vmul.f32 %v1147, %v1117
        %v1156 = vmul.f32 %v1148, %v1120
        %v1157 = vmul.f32 %v1149, %v1125
        %v1158 = vmul.f32 %v1150, %v1128
        %v1159 = vmul.f32 %v1151, %v1133
        %v1160 = vmul.f32 %v1152, %v1136
        %v1161 = vmul.f32 %v1153, %v1141
        %v1162 = vmul.f32 %v1154, %v1144
        %1164 = vset.pattern.permute.xlu0 0
        %1165 = vperm.xlu0 %1164, %v1030
        %v1166 = vpop.permute.xlu0 %1165
        %1169 = vset.pattern.permute.xlu0 0
        %1170 = vperm.xlu0 %1169, %v1032
        %v1171 = vpop.permute.xlu0 %1170
        %1174 = vset.pattern.permute.xlu0 0
        %1175 = vperm.xlu0 %1174, %v1034
        %v1176 = vpop.permute.xlu0 %1175
        %1179 = vset.pattern.permute.xlu0 0
        %1180 = vperm.xlu0 %1179, %v1036
        %v1181 = vpop.permute.xlu0 %1180
        %1184 = vset.pattern.permute.xlu0 0
        %1185 = vperm.xlu0 %1184, %v1038
        %v1186 = vpop.permute.xlu0 %1185
        %1189 = vset.pattern.permute.xlu0 0
        %1190 = vperm.xlu0 %1189, %v1040
        %v1191 = vpop.permute.xlu0 %1190
        %1194 = vset.pattern.permute.xlu0 0
        %1195 = vperm.xlu0 %1194, %v1042
        %v1196 = vpop.permute.xlu0 %1195
        %1199 = vset.pattern.permute.xlu0 0
        %1200 = vperm.xlu0 %1199, %v1044
        %v1201 = vpop.permute.xlu0 %1200
        %v1203 = vmul.f32 %v1155, %v1166
        %v1204 = vmul.f32 %v1156, %v1171
        %v1205 = vmul.f32 %v1157, %v1176
        %v1206 = vmul.f32 %v1158, %v1181
        %v1207 = vmul.f32 %v1159, %v1186
        %v1208 = vmul.f32 %v1160, %v1191
        %v1209 = vmul.f32 %v1161, %v1196
        %v1210 = vmul.f32 %v1162, %v1201
        %v1211 = vpack.c.bf16 %v1204, %v1203
        %v1212 = vpack.c.bf16 %v1206, %v1205
        %v1213 = vpack.c.bf16 %v1208, %v1207
        %v1214 = vpack.c.bf16 %v1210, %v1209
        %1215 = vxpose.xlu0.c.b16.start [1/8] %v1211, 128
        %1216 = vxpose.xlu0.c.b16.cont [2/8] %v1212, 128
        %1217 = vxpose.xlu0.c.b16.cont [3/8] %v1213, 128
        %1218 = vxpose.xlu0.c.b16.cont [4/8] %v1214, 128
        %1219 = vxpose.xlu0.c.b16.cont [5/8] 0, 128
        %1220 = vxpose.xlu0.c.b16.cont [6/8] 0, 128
        %1221 = vxpose.xlu0.c.b16.cont [7/8] 0, 128
        %1222 = vxpose.xlu0.c.b16.end [8/8] 0, 128
        %v1223 = vpop.trf.xlu0
        %v1224 = vpop.trf.xlu0
        %v1225 = vpop.trf.xlu0
        %v1226 = vpop.trf.xlu0
        %v1227 = vpop.trf.xlu0
        %v1228 = vpop.trf.xlu0
        %v1229 = vpop.trf.xlu0
        %v1230 = vpop.trf.xlu0
        %vm1235 = vcmask 523264
        %v1237 = vsel %vm1235, %v1223, 0
        %1239 = vmatprep.subr.bf16.mxu0 0
        %1240 = vmatpush1.bf16.msra.mxu0 %v767
        %1241 = vmatprep.subr.bf16.mxu0 0
        %1242 = vmatpush1.bf16.msra.mxu0 %v768
        %1243 = vmatprep.subr.bf16.mxu0 0
        %1244 = vmatpush1.bf16.msra.mxu0 %v769
        %1245 = vmatprep.subr.bf16.mxu0 0
        %1246 = vmatpush1.bf16.msra.mxu0 %v770
        %1247 = vmatprep.subr.bf16.mxu0 0
        %1248 = vmatpush1.bf16.msra.mxu0 0
        %1249 = vmatprep.subr.bf16.mxu0 0
        %1250 = vmatpush1.bf16.msra.mxu0 0
        %1251 = vmatprep.subr.bf16.mxu0 0
        %1252 = vmatpush1.bf16.msra.mxu0 0
        %1253 = vmatprep.subr.bf16.mxu0 0
        %1254 = vmatpush1.bf16.msra.mxu0 0
        %1255 = vmatprep.subr.bf16.mxu0 0
        %1256 = vmatpush1.bf16.msra.mxu0 0
        %1257 = vmatprep.subr.bf16.mxu0 0
        %1258 = vmatpush1.bf16.msra.mxu0 0
        %1259 = vmatprep.subr.bf16.mxu0 0
        %1260 = vmatpush1.bf16.msra.mxu0 0
        %1261 = vmatprep.subr.bf16.mxu0 0
        %1262 = vmatpush1.bf16.msra.mxu0 0
        %1263 = vmatprep.subr.bf16.mxu0 0
        %1264 = vmatpush1.bf16.msra.mxu0 0
        %1265 = vmatprep.subr.bf16.mxu0 0
        %1266 = vmatpush1.bf16.msra.mxu0 0
        %1267 = vmatprep.subr.bf16.mxu0 0
        %1268 = vmatpush1.bf16.msra.mxu0 0
        %1269 = vmatprep.subr.bf16.mxu0 0
        %1270 = vmatpush1.bf16.msra.mxu0 0
        %1271 = vmatprep.mubr.bf16.mxu0 0
        %1272 = vmatmul.mubr.bf16.gmra.mrb[0].mxu0 %v1237
        %v1273 = vpop.f32.mrb[0].mxu0
        %v1274 = vadd.f32 0.0, %v1273
        %v1275 = vpop.f32.mrb[0].mxu0
        %v1276 = vpop.f32.mrb[0].mxu0
        %v1277 = vpop.f32.mrb[0].mxu0
        %1278 = vdwg.mxu0
        %1279 = vmatprep.subr.bf16.mxu0 0
        %1280 = vmatpush1.bf16.msra.mxu0 1065369472
        %1281 = vmatprep.subr.bf16.mxu0 0
        %1282 = vmatpush1.bf16.msra.mxu0 1065369472
        %1283 = vmatprep.subr.bf16.mxu0 0
        %1284 = vmatpush1.bf16.msra.mxu0 1065369472
        %1285 = vmatprep.subr.bf16.mxu0 0
        %1286 = vmatpush1.bf16.msra.mxu0 1065369472
        %1287 = vmatprep.subr.bf16.mxu0 0
        %1288 = vmatpush1.bf16.msra.mxu0 0
        %1289 = vmatprep.subr.bf16.mxu0 0
        %1290 = vmatpush1.bf16.msra.mxu0 0
        %1291 = vmatprep.subr.bf16.mxu0 0
        %1292 = vmatpush1.bf16.msra.mxu0 0
        %1293 = vmatprep.subr.bf16.mxu0 0
        %1294 = vmatpush1.bf16.msra.mxu0 0
        %1295 = vmatprep.subr.bf16.mxu0 0
        %1296 = vmatpush1.bf16.msra.mxu0 0
        %1297 = vmatprep.subr.bf16.mxu0 0
        %1298 = vmatpush1.bf16.msra.mxu0 0
        %1299 = vmatprep.subr.bf16.mxu0 0
        %1300 = vmatpush1.bf16.msra.mxu0 0
        %1301 = vmatprep.subr.bf16.mxu0 0
        %1302 = vmatpush1.bf16.msra.mxu0 0
        %1303 = vmatprep.subr.bf16.mxu0 0
        %1304 = vmatpush1.bf16.msra.mxu0 0
        %1305 = vmatprep.subr.bf16.mxu0 0
        %1306 = vmatpush1.bf16.msra.mxu0 0
        %1307 = vmatprep.subr.bf16.mxu0 0
        %1308 = vmatpush1.bf16.msra.mxu0 0
        %1309 = vmatprep.subr.bf16.mxu0 0
        %1310 = vmatpush1.bf16.msra.mxu0 0
        %1311 = vmatprep.mubr.bf16.mxu0 0
        %1312 = vmatmul.mubr.bf16.gmra.mrb[0].mxu0 %v1237
        %v1313 = vpop.f32.mrb[0].mxu0
        %v1314 = vadd.f32 0.0, %v1313
        %v1315 = vpop.f32.mrb[0].mxu0
        %v1316 = vpop.f32.mrb[0].mxu0
        %v1317 = vpop.f32.mrb[0].mxu0
        %1318 = vdwg.mxu0
        %vm1319 = vcmp.gt.f32.partialorder %v1314, 0.0
        %v1320 = vsel %vm1319, %v1314, 1.0
        %v1321 = vrcp.pop %v1320
        %1323 = vset.pattern.permute.xlu0 0
        %1324 = vperm.xlu0 %1323, %v1321
        %v1325 = vpop.permute.xlu0 %1324
        %v1327 = vmul.f32 %v1274, %v1325
        %v1328 = vld [vmem:[%s11] sm:$0xff]
        %v1329 = vld [vmem:[%s11 + $0x8] sm:$0xff]
        %v1330 = vld [vmem:[%s11 + $0x10] sm:$0xff]
        %v1331 = vld [vmem:[%s11 + $0x18] sm:$0xff]
        %v1333 = vsel %vm486, %v1327, 0
        %1335 = vmatprep.subr.mxu0 0.0
        %1336 = vmatpush1.msra.mxu0 %v1328
        %1337 = vmatprep.subr.mxu0 0.0
        %1338 = vmatpush1.msra.mxu0 %v1329
        %1339 = vmatprep.subr.mxu0 0.0
        %1340 = vmatpush1.msra.mxu0 %v1330
        %1341 = vmatprep.subr.mxu0 0.0
        %1342 = vmatpush1.msra.mxu0 %v1331
        %1343 = vmatprep.subr.mxu0 0.0
        %1344 = vmatpush1.msra.mxu0 0.0
        %1345 = vmatprep.subr.mxu0 0.0
        %1346 = vmatpush1.msra.mxu0 0.0
        %1347 = vmatprep.subr.mxu0 0.0
        %1348 = vmatpush1.msra.mxu0 0.0
        %1349 = vmatprep.subr.mxu0 0.0
        %1350 = vmatpush1.msra.mxu0 0.0
        %1351 = vmatprep.subr.mxu0 0.0
        %1352 = vmatpush1.msra.mxu0 0.0
        %1353 = vmatprep.subr.mxu0 0.0
        %1354 = vmatpush1.msra.mxu0 0.0
        %1355 = vmatprep.subr.mxu0 0.0
        %1356 = vmatpush1.msra.mxu0 0.0
        %1357 = vmatprep.subr.mxu0 0.0
        %1358 = vmatpush1.msra.mxu0 0.0
        %1359 = vmatprep.subr.mxu0 0.0
        %1360 = vmatpush1.msra.mxu0 0.0
        %1361 = vmatprep.subr.mxu0 0.0
        %1362 = vmatpush1.msra.mxu0 0.0
        %1363 = vmatprep.subr.mxu0 0.0
        %1364 = vmatpush1.msra.mxu0 0.0
        %1365 = vmatprep.subr.mxu0 0.0
        %1366 = vmatpush1.msra.mxu0 0.0
        %1367 = vmatprep.subr.mxu0 0.0
        %1368 = vmatpush1.msra.mxu0 0.0
        %1369 = vmatprep.subr.mxu0 0.0
        %1370 = vmatpush1.msra.mxu0 0.0
        %1371 = vmatprep.subr.mxu0 0.0
        %1372 = vmatpush1.msra.mxu0 0.0
        %1373 = vmatprep.subr.mxu0 0.0
        %1374 = vmatpush1.msra.mxu0 0.0
        %1375 = vmatprep.subr.mxu0 0.0
        %1376 = vmatpush1.msra.mxu0 0.0
        %1377 = vmatprep.subr.mxu0 0.0
        %1378 = vmatpush1.msra.mxu0 0.0
        %1379 = vmatprep.subr.mxu0 0.0
        %1380 = vmatpush1.msra.mxu0 0.0
        %1381 = vmatprep.subr.mxu0 0.0
        %1382 = vmatpush1.msra.mxu0 0.0
        %1383 = vmatprep.subr.mxu0 0.0
        %1384 = vmatpush1.msra.mxu0 0.0
        %1385 = vmatprep.subr.mxu0 0.0
        %1386 = vmatpush1.msra.mxu0 0.0
        %1387 = vmatprep.subr.mxu0 0.0
        %1388 = vmatpush1.msra.mxu0 0.0
        %1389 = vmatprep.subr.mxu0 0.0
        %1390 = vmatpush1.msra.mxu0 0.0
        %1391 = vmatprep.subr.mxu0 0.0
        %1392 = vmatpush1.msra.mxu0 0.0
        %1393 = vmatprep.subr.mxu0 0.0
        %1394 = vmatpush1.msra.mxu0 0.0
        %1395 = vmatprep.subr.mxu0 0.0
        %1396 = vmatpush1.msra.mxu0 0.0
        %1397 = vmatprep.subr.mxu0 0.0
        %1398 = vmatpush1.msra.mxu0 0.0
        %1399 = vmatprep.mubr.f32.mxu0 0.0
        %1400 = vmatmul.mubr.f32.gmra.mrb[0].mxu0 %v1333
        %v1401 = vpop.f32.mrb[0].mxu0
        %v1402 = vadd.f32 0.0, %v1401
        %v1403 = vpop.f32.mrb[0].mxu0
        %1404 = vdwg.mxu0
        %1405 = vst [vmem:[%s433] sm:$0xff] %v1402
        %s1406 = sand.u32 %s301, 1
        %s1407 = scalar_lea.sflag [#allocation3], %s1406
        %s1408 = sand.u32 %s301, 1
        %s1409 = smul.addr %s1408, 8
        %s1410 = scalar_lea.vmem [#allocation2], %s1409
        // Predicated region
        $region69: #{tpu_custom_call.1} parent=67 // pred_check
          %p1411 = pneg %p311
        $region70: #{tpu_custom_call.1} parent=67 // pred_check_branch
          %1413 = sbr.rel (%p1411) target = $region72
        $region71: #{tpu_custom_call.1} parent=67 // pred_region
          %s1415 = ssub.s32 128, 128
          %1416 = vsyncadd %s1407, %s1415
          %s1417 = smul.addr %s26, 128
          %s1418 = scalar_lea.hbm %s12, %s1417
          %s1420 = sshll.u32 %s1410, 4
          %s1421 = int_to_ptr.vmem [resolvable:$true] %s1420
          %1423 = dma.vmem_to_hbm [thread:$0]  %s1421, 128, %s1418, %s1407
        $region72: #{tpu_custom_call.1} parent=67 // pred_fallthru
          _
      $region68: #{tpu_custom_call.1} parent=5 // pred_fallthru
        _
      %p1424 = scmp.le.s32.totalorder 2, %s21
      // Predicated region
      $region73: #{tpu_custom_call.1} parent=5 // pred_check
        %p1425 = pneg %p1424
      $region74: #{tpu_custom_call.1} parent=5 // pred_check_branch
        %1427 = sbr.rel (%p1425) target = $region76
      $region75: #{tpu_custom_call.1} parent=5 // pred_region
        %s1428 = ssub.s32 %s21, 2
        // Predicated region
        $region77: #{tpu_custom_call.1} parent=75 // pred_check
          %p1429 = pneg %p317
        $region78: #{tpu_custom_call.1} parent=75 // pred_check_branch
          %1431 = sbr.rel (%p1429) target = $region80
        $region79: #{tpu_custom_call.1} parent=75 // pred_region
          %s1432 = sand.u32 %s302, 1
          %s1433 = scalar_lea.sflag [#allocation3], %s1432
          %s1434 = sand.u32 %s302, 1
          %s1435 = smul.addr %s1434, 8
          %s1436 = scalar_lea.vmem [#allocation2], %s1435
          %1437 = dma.done %s1433, 128
        $region80: #{tpu_custom_call.1} parent=75 // pred_fallthru
          _
      $region76: #{tpu_custom_call.1} parent=5 // pred_fallthru
        _
    $region6: #{tpu_custom_call.1} parent=1 // loop_footer
      %s25 = sadd.s32 1, %s21
    $region7: #{tpu_custom_call.1} parent=1 // loop_footer_branch
      %20 = sbr.rel target = $region3
    $region8: #{tpu_custom_call.1} parent=1 // loop_exit
      _
    %1438 = vsyncpa [#allocation3], 1
    %s1439 = scalar_lea.sflag [#allocation3], 1
    %1440 = vsyncpa %s1439, 1

</llo_original>
